<compile_context>
chip_gen: v6e
topology: v6e:2x2x1
jax: 0.10.0
libtpu: 0.0.40
codegen_flags: <defaults>
</compile_context>

<pallas_src>
import functools

import jax
import jax.numpy as jnp
from jax.experimental import pallas as pl
from jax.experimental.pallas import tpu as pltpu


def _round_up(a: int, b: int) -> int:
    return ((a + b - 1) // b) * b


def _cdiv(a: int, b: int) -> int:
    return -(-a // b)


# ---------------------------------------------------------------------------
# Kernels
# ---------------------------------------------------------------------------

def _layernorm_f32(y, g, b, *, eps, d_true):
    """LayerNorm in f32 on a (tm, d_pad) tile; padded columns of y are zero."""
    d_pad = y.shape[-1]
    if d_pad == d_true:
        mean = jnp.mean(y, axis=-1, keepdims=True)
        var = jnp.mean(jnp.square(y - mean), axis=-1, keepdims=True)
    else:
        # Padded feature columns are zero, so plain sums are exact; divide by the
        # true feature count (biased variance, matching torch LayerNorm).
        inv_n = 1.0 / d_true
        mean = jnp.sum(y, axis=-1, keepdims=True) * inv_n
        var = jnp.sum(y * y, axis=-1, keepdims=True) * inv_n - mean * mean
    var = jnp.maximum(var, 0.0)  # guard against f32 cancellation going negative
    yn = (y - mean) * jax.lax.rsqrt(var + eps)
    return yn * g.astype(jnp.float32) + b.astype(jnp.float32)


def _ffn_kernel_fused(x_ref, w1_ref, b1_ref, w2_ref, b2_ref, g_ref, beta_ref,
                      o_ref, *, eps, d_in_true):
    """Collapsed-K path: full FFN + residual + LayerNorm for one row tile."""
    xv = x_ref[...]                                            # (tm, d_in_p)
    h = jnp.dot(xv, w1_ref[...], preferred_element_type=jnp.float32)
    h = jnp.maximum(h + b1_ref[...].astype(jnp.float32), 0.0)  # (tm, d_hid_p)
    y = jnp.dot(h.astype(w2_ref.dtype), w2_ref[...],
                preferred_element_type=jnp.float32)
    y = y + b2_ref[...].astype(jnp.float32) + xv.astype(jnp.float32)
    o_ref[...] = _layernorm_f32(y, g_ref[...], beta_ref[...],
                                eps=eps, d_true=d_in_true).astype(o_ref.dtype)


def _ffn_kernel_ktiled(x_ref, w1_ref, b1_ref, w2_ref, b2_ref, g_ref, beta_ref,
                       o_ref, acc_ref, *, eps, d_in_true):
    """K-tiled fallback: d_hid split over grid axis 1 with an f32 accumulator."""
    k = pl.program_id(1)
    xv = x_ref[...]                                            # (tm, d_in_p)

    @pl.when(k == 0)
    def _init():
        # Initialize with b2 so the finalize branch does not need '+ b2'.
        acc_ref[...] = jnp.broadcast_to(b2_ref[...].astype(jnp.float32),
                                        acc_ref.shape)

    h = jnp.dot(xv, w1_ref[...], preferred_element_type=jnp.float32)
    h = jnp.maximum(h + b1_ref[...].astype(jnp.float32), 0.0)  # (tm, tk)
    acc_ref[...] += jnp.dot(h.astype(w2_ref.dtype), w2_ref[...],
                            preferred_element_type=jnp.float32)

    @pl.when(k == pl.num_programs(1) - 1)
    def _finalize():
        y = acc_ref[...] + xv.astype(jnp.float32)
        o_ref[...] = _layernorm_f32(y, g_ref[...], beta_ref[...],
                                    eps=eps, d_true=d_in_true).astype(o_ref.dtype)


# ---------------------------------------------------------------------------
# VMEM budgeting / tile selection
# ---------------------------------------------------------------------------

def _vmem_caps(forced_budget=None):
    try:
        cap = int(pltpu.get_tpu_info().vmem_capacity_bytes)
    except Exception:
        cap = 64 << 20  # conservative: v7x has the smallest per-TC VMEM
    budget = int(cap * 0.7)  # headroom for compiler scratch / spills
    if forced_budget is not None:
        budget = min(budget, int(forced_budget))
    return cap, budget


def _fp_collapsed(tm, d_in_p, d_hid_p, xb, ob, wb):
    act = 2 * tm * d_in_p * xb                        # x tile, double-buffered
    out = 2 * tm * d_in_p * ob                        # out tile, double-buffered
    wts = 2 * (d_in_p * d_hid_p + d_hid_p * d_in_p) * wb
    vec = 2 * (d_hid_p + 3 * d_in_p) * 4
    tmp = tm * d_hid_p * 4 + 2 * tm * d_in_p * 4      # f32 hidden + LN temporaries
    return act + out + wts + vec + tmp


def _fp_ktiled(tm, tk, d_in_p, d_hid_p, xb, ob, wb, wbuf=3):
    del d_hid_p
    act = 2 * tm * d_in_p * xb
    out = 2 * tm * d_in_p * ob
    wts = wbuf * (d_in_p * tk + tk * d_in_p) * wb     # 3-deep buffered weight slabs
    vec = wbuf * tk * 4 + 2 * 3 * d_in_p * 4
    acc = tm * d_in_p * 4
    tmp = tm * tk * 4 + 2 * tm * d_in_p * 4
    return act + out + wts + vec + acc + tmp


def _choose_config(rows, d_in_p, d_hid_p, xb, ob, wb, budget):
    # Row tile: large enough to amortise per-step overhead, but guarantee >= 2 row
    # tiles when possible so the "parallel" axis shards across both v7x TensorCores.
    tm_pref = min(256, _round_up(max(_cdiv(rows, 2), 8), 8))
    tm_cands = []
    for t in (tm_pref, 128, 64, 32, 16, 8):
        t = min(t, tm_pref)
        if t not in tm_cands:
            tm_cands.append(t)

    # Preferred: collapse K (weights fully resident, no accumulator RMW).
    for tm in tm_cands:
        if _fp_collapsed(tm, d_in_p, d_hid_p, xb, ob, wb) <= budget:
            return tm, None

    # Fallback: K-tiled with an f32 accumulator (large d_hid / tight budget).
    tk_cands = []
    tk = d_hid_p
    while True:
        tk_cands.append(tk)
        if tk <= 128:
            break
        tk = _round_up(_cdiv(tk, 2), 128)
    for tm in tm_cands:
        for tk in tk_cands:
            if _fp_ktiled(tm, tk, d_in_p, d_hid_p, xb, ob, wb) <= budget:
                return tm, tk
    return tm_cands[-1], 128  # nothing fits cleanly; smallest tiles + raised limit


def _weight_spec(shape, index_map):
    """Weight-slab BlockSpec with 3-deep buffering when the API supports it."""
    try:
        return pl.BlockSpec(shape, index_map, pipeline_mode=pl.Buffered(3))
    except TypeError:
        return pl.BlockSpec(shape, index_map)


# ---------------------------------------------------------------------------
# Wrapper
# ---------------------------------------------------------------------------

def positionwise_feed_forward(x, w1, b1, w2, b2, gamma, beta, *,
                              eps=1e-6, cast_matmul_to_bf16=False,
                              max_vmem_budget_bytes=None):
    """x: (B, S, d_in); w1: (d_in, d_hid); w2: (d_hid, d_in); b2/gamma/beta: (d_in,)."""
    B, S, d_in = x.shape
    d_hid = w1.shape[1]
    rows = B * S

    d_in_p = _round_up(d_in, 128)
    d_hid_p = _round_up(d_hid, 128)

    out_dtype = x.dtype
    mm_dtype = (jnp.bfloat16 if (cast_matmul_to_bf16 and x.dtype == jnp.float32)
                else x.dtype)
    xb = jnp.dtype(mm_dtype).itemsize
    wb = jnp.dtype(mm_dtype).itemsize
    ob = jnp.dtype(out_dtype).itemsize

    phys_cap, budget = _vmem_caps(max_vmem_budget_bytes)
    tm, tk = _choose_config(rows, d_in_p, d_hid_p, xb, ob, wb, budget)

    rows_p = _round_up(rows, tm)
    if tk is not None:
        d_hid_p = _round_up(d_hid_p, tk)
        footprint = _fp_ktiled(tm, tk, d_in_p, d_hid_p, xb, ob, wb)
    else:
        footprint = _fp_collapsed(tm, d_in_p, d_hid_p, xb, ob, wb)

    vmem_limit = int(min(max(footprint + (8 << 20), 32 << 20), phys_cap - (2 << 20)))
    vmem_limit = max(vmem_limit, footprint + (1 << 20))

    # Pad: rows to the row tile, features to lane-dense multiples of 128.
    x2d = x.reshape(rows, d_in)
    w1c, w2c = w1, w2
    if mm_dtype != x.dtype:
        x2d = x2d.astype(mm_dtype)
        w1c = w1c.astype(mm_dtype)
        w2c = w2c.astype(mm_dtype)
    x2d = jnp.pad(x2d, ((0, rows_p - rows), (0, d_in_p - d_in)))
    w1p = jnp.pad(w1c, ((0, d_in_p - d_in), (0, d_hid_p - d_hid)))
    b1p = jnp.pad(b1, (0, d_hid_p - d_hid)).reshape(1, d_hid_p)
    w2p = jnp.pad(w2c, ((0, d_hid_p - d_hid), (0, d_in_p - d_in)))
    b2p = jnp.pad(b2, (0, d_in_p - d_in)).reshape(1, d_in_p)
    gp = jnp.pad(gamma, (0, d_in_p - d_in)).reshape(1, d_in_p)
    bp = jnp.pad(beta, (0, d_in_p - d_in)).reshape(1, d_in_p)

    n_row_tiles = rows_p // tm
    w_bytes = (w1p.size + w2p.size) * wb
    vec_bytes = (b1p.size + b2p.size + gp.size + bp.size) * jnp.dtype(b1p.dtype).itemsize
    weight_passes = 1 if tk is None else n_row_tiles
    cost = pl.CostEstimate(
        flops=4 * rows_p * d_in_p * d_hid_p,
        transcendentals=rows_p,
        bytes_accessed=rows_p * d_in_p * (xb + ob)
        + weight_passes * w_bytes + vec_bytes,
    )

    if tk is None:
        # Collapsed-K path: weights resident, single grid axis over row tiles.
        kernel = functools.partial(_ffn_kernel_fused, eps=eps, d_in_true=d_in)
        grid = (n_row_tiles,)
        in_specs = [
            pl.BlockSpec((tm, d_in_p), lambda i: (i, 0)),         # x rows
            pl.BlockSpec((d_in_p, d_hid_p), lambda i: (0, 0)),    # w1 (resident)
            pl.BlockSpec((1, d_hid_p), lambda i: (0, 0)),         # b1
            pl.BlockSpec((d_hid_p, d_in_p), lambda i: (0, 0)),    # w2 (resident)
            pl.BlockSpec((1, d_in_p), lambda i: (0, 0)),          # b2
            pl.BlockSpec((1, d_in_p), lambda i: (0, 0)),          # LN gamma
            pl.BlockSpec((1, d_in_p), lambda i: (0, 0)),          # LN beta
        ]
        out_specs = pl.BlockSpec((tm, d_in_p), lambda i: (i, 0))
        scratch_shapes = []
        dims = ("parallel",)
    else:
        # K-tiled fallback: trailing "arbitrary" axis over d_hid with f32 accumulator.
        kernel = functools.partial(_ffn_kernel_ktiled, eps=eps, d_in_true=d_in)
        grid = (n_row_tiles, d_hid_p // tk)
        in_specs = [
            pl.BlockSpec((tm, d_in_p), lambda i, k: (i, 0)),      # x rows (resident over k)
            _weight_spec((d_in_p, tk), lambda i, k: (0, k)),      # w1 K-slab
            pl.BlockSpec((1, tk), lambda i, k: (0, k)),           # b1 K-slab
            _weight_spec((tk, d_in_p), lambda i, k: (k, 0)),      # w2 K-slab
            pl.BlockSpec((1, d_in_p), lambda i, k: (0, 0)),       # b2
            pl.BlockSpec((1, d_in_p), lambda i, k: (0, 0)),       # LN gamma
            pl.BlockSpec((1, d_in_p), lambda i, k: (0, 0)),       # LN beta
        ]
        out_specs = pl.BlockSpec((tm, d_in_p), lambda i, k: (i, 0))
        scratch_shapes = [pltpu.VMEM((tm, d_in_p), jnp.float32)]
        dims = ("parallel", "arbitrary")

    out = pl.pallas_call(
        kernel,
        out_shape=jax.ShapeDtypeStruct((rows_p, d_in_p), out_dtype),
        grid_spec=pltpu.PrefetchScalarGridSpec(
            num_scalar_prefetch=0,
            grid=grid,
            in_specs=in_specs,
            out_specs=out_specs,
            scratch_shapes=scratch_shapes,
        ),
        compiler_params=pltpu.CompilerParams(
            dimension_semantics=dims,
            vmem_limit_bytes=vmem_limit,
        ),
        cost_estimate=cost,
    )(x2d, w1p, b1p, w2p, b2p, gp, bp)

    return out[:rows, :d_in].reshape(B, S, d_in)


# ---------------------------------------------------------------------------
# Reference + test harness
# ---------------------------------------------------------------------------

def _reference(x, w1, b1, w2, b2, gamma, beta, eps=1e-6):
    hi = jax.lax.Precision.HIGHEST
    h = jnp.maximum(jnp.dot(x, w1, precision=hi) + b1, 0.0)
    y = jnp.dot(h, w2, precision=hi) + b2 + x
    mean = jnp.mean(y, axis=-1, keepdims=True)
    var = jnp.mean(jnp.square(y - mean), axis=-1, keepdims=True)
    return (y - mean) * jax.lax.rsqrt(var + eps) * gamma + beta


def _make_case(key, B, S, d_in, d_hid):
    kx, k1, kb1, k2, kb2 = jax.random.split(key, 5)
    x = jax.random.normal(kx, (B, S, d_in), dtype=jnp.float32)
    # nn.Linear(d_in, d_hid).weight is (d_hid, d_in); we store the transpose.
    w1 = jax.random.normal(k1, (d_in, d_hid), dtype=jnp.float32) * (1.0 / jnp.sqrt(d_in))
    b1 = jax.random.normal(kb1, (d_hid,), dtype=jnp.float32) * 0.01
    w2 = jax.random.normal(k2, (d_hid, d_in), dtype=jnp.float32) * (1.0 / jnp.sqrt(d_hid))
    b2 = jax.random.normal(kb2, (d_in,), dtype=jnp.float32) * 0.01
    gamma = jnp.ones((d_in,), dtype=jnp.float32)
    beta = jnp.zeros((d_in,), dtype=jnp.float32)
    return x, w1, b1, w2, b2, gamma, beta


if __name__ == "__main__":
    # Case 1: lane-dense feature dims; collapsed-K path, 2 row tiles (megacore-friendly).
    args = _make_case(jax.random.PRNGKey(0), 2, 96, 128, 512)
    out = jax.block_until_ready(positionwise_feed_forward(*args))
    ref = _reference(*args)
    assert out.shape == args[0].shape and out.dtype == args[0].dtype
    assert jnp.allclose(out, ref, atol=2e-3, rtol=2e-3), "mismatch vs reference (case 1)"

    # Case 2: non-128-multiple feature dims; exercises feature padding + masked-LN stats.
    args2 = _make_case(jax.random.PRNGKey(1), 2, 8, 48, 72)
    out2 = jax.block_until_ready(positionwise_feed_forward(*args2))
    ref2 = _reference(*args2)
    assert out2.shape == args2[0].shape and out2.dtype == args2[0].dtype
    assert jnp.allclose(out2, ref2, atol=2e-3, rtol=2e-3), "mismatch vs reference (case 2)"

    # Case 3: artificially tiny VMEM budget to exercise the K-tiled fallback path
    # (f32 accumulator seeded with b2, init/finalize pl.when branches).
    args3 = _make_case(jax.random.PRNGKey(2), 1, 64, 128, 1024)
    out3 = jax.block_until_ready(
        positionwise_feed_forward(*args3, max_vmem_budget_bytes=2 << 20))
    ref3 = _reference(*args3)
    assert out3.shape == args3[0].shape and out3.dtype == args3[0].dtype
    assert jnp.allclose(out3, ref3, atol=2e-3, rtol=2e-3), "mismatch vs reference (case 3)"

    print("KERNEL_OK")
</pallas_src>

<mosaic_0001>
module attributes {stable_mosaic.version = 11 : i64} {
  func.func @_ffn_kernel_fused(%arg0: i32, %arg1: memref<96x128xf32, #tpu.memory_space<vmem>>, %arg2: memref<128x512xf32, #tpu.memory_space<vmem>>, %arg3: memref<1x512xf32, #tpu.memory_space<vmem>>, %arg4: memref<512x128xf32, #tpu.memory_space<vmem>>, %arg5: memref<1x128xf32, #tpu.memory_space<vmem>>, %arg6: memref<1x128xf32, #tpu.memory_space<vmem>>, %arg7: memref<1x128xf32, #tpu.memory_space<vmem>>, %arg8: memref<96x128xf32, #tpu.memory_space<vmem>>) attributes {dimension_semantics = [#tpu.dimension_semantics<parallel>], iteration_bounds = array<i64: 2>, scalar_prefetch = 0 : i64, scratch_operands = 0 : i64, tpu.core_type = #tpu.core_type<tc>, window_params = [{transform_indices = @transform_0, window_bounds = array<i64: 96, 128>}, {pipeline_mode = #tpu.pipeline_mode<synchronous>, transform_indices = @transform_1, window_bounds = array<i64: 128, 512>}, {pipeline_mode = #tpu.pipeline_mode<synchronous>, transform_indices = @transform_2, window_bounds = array<i64: 1, 512>}, {pipeline_mode = #tpu.pipeline_mode<synchronous>, transform_indices = @transform_3, window_bounds = array<i64: 512, 128>}, {pipeline_mode = #tpu.pipeline_mode<synchronous>, transform_indices = @transform_4, window_bounds = array<i64: 1, 128>}, {pipeline_mode = #tpu.pipeline_mode<synchronous>, transform_indices = @transform_5, window_bounds = array<i64: 1, 128>}, {pipeline_mode = #tpu.pipeline_mode<synchronous>, transform_indices = @transform_6, window_bounds = array<i64: 1, 128>}, {transform_indices = @transform_7, window_bounds = array<i64: 96, 128>}]} {
    %c0 = arith.constant 0 : index
    %c0_0 = arith.constant 0 : index
    %0 = vector.load %arg1[%c0, %c0_0] : memref<96x128xf32, #tpu.memory_space<vmem>>, vector<96x128xf32>
    %c0_1 = arith.constant 0 : index
    %c0_2 = arith.constant 0 : index
    %1 = vector.load %arg2[%c0_1, %c0_2] : memref<128x512xf32, #tpu.memory_space<vmem>>, vector<128x512xf32>
    %cst = arith.constant dense<0.000000e+00> : vector<96x512xf32>
    %2 = tpu.matmul %0, %1, %cst {dimension_numbers = #tpu.dot_dimension_numbers<[1], [0], [0], [1], [0, 0, 1, 1], [], []>} : vector<96x128xf32>, vector<128x512xf32>, vector<96x512xf32> -> vector<96x512xf32>
    %c0_3 = arith.constant 0 : index
    %c0_4 = arith.constant 0 : index
    %3 = vector.load %arg3[%c0_3, %c0_4] : memref<1x512xf32, #tpu.memory_space<vmem>>, vector<1x512xf32>
    %4 = vector.broadcast %3 : vector<1x512xf32> to vector<96x512xf32>
    %5 = arith.addf %2, %4 : vector<96x512xf32>
    %cst_5 = arith.constant 0.000000e+00 : f32
    %6 = vector.broadcast %cst_5 : f32 to vector<96x512xf32>
    %7 = arith.maximumf %5, %6 : vector<96x512xf32>
    %c0_6 = arith.constant 0 : index
    %c0_7 = arith.constant 0 : index
    %8 = vector.load %arg4[%c0_6, %c0_7] : memref<512x128xf32, #tpu.memory_space<vmem>>, vector<512x128xf32>
    %cst_8 = arith.constant dense<0.000000e+00> : vector<96x128xf32>
    %9 = tpu.matmul %7, %8, %cst_8 {dimension_numbers = #tpu.dot_dimension_numbers<[1], [0], [0], [1], [0, 0, 1, 1], [], []>} : vector<96x512xf32>, vector<512x128xf32>, vector<96x128xf32> -> vector<96x128xf32>
    %c0_9 = arith.constant 0 : index
    %c0_10 = arith.constant 0 : index
    %10 = vector.load %arg5[%c0_9, %c0_10] : memref<1x128xf32, #tpu.memory_space<vmem>>, vector<1x128xf32>
    %11 = vector.broadcast %10 : vector<1x128xf32> to vector<96x128xf32>
    %12 = arith.addf %9, %11 : vector<96x128xf32>
    %13 = arith.addf %12, %0 : vector<96x128xf32>
    %c0_11 = arith.constant 0 : index
    %c0_12 = arith.constant 0 : index
    %14 = vector.load %arg6[%c0_11, %c0_12] : memref<1x128xf32, #tpu.memory_space<vmem>>, vector<1x128xf32>
    %c0_13 = arith.constant 0 : index
    %c0_14 = arith.constant 0 : index
    %15 = vector.load %arg7[%c0_13, %c0_14] : memref<1x128xf32, #tpu.memory_space<vmem>>, vector<1x128xf32>
    %cst_15 = arith.constant dense<0.000000e+00> : vector<96xf32>
    %16 = vector.multi_reduction <add>, %13, %cst_15 [1] : vector<96x128xf32> to vector<96xf32>
    %17 = vector.shape_cast %16 : vector<96xf32> to vector<96x1xf32>
    %cst_16 = arith.constant 1.280000e+02 : f32
    %18 = vector.broadcast %cst_16 : f32 to vector<96x1xf32>
    %19 = arith.divf %17, %18 : vector<96x1xf32>
    %20 = vector.broadcast %19 : vector<96x1xf32> to vector<96x128xf32>
    %21 = arith.subf %13, %20 : vector<96x128xf32>
    %22 = arith.mulf %21, %21 : vector<96x128xf32>
    %cst_17 = arith.constant dense<0.000000e+00> : vector<96xf32>
    %23 = vector.multi_reduction <add>, %22, %cst_17 [1] : vector<96x128xf32> to vector<96xf32>
    %24 = vector.shape_cast %23 : vector<96xf32> to vector<96x1xf32>
    %cst_18 = arith.constant 1.280000e+02 : f32
    %25 = vector.broadcast %cst_18 : f32 to vector<96x1xf32>
    %26 = arith.divf %24, %25 : vector<96x1xf32>
    %cst_19 = arith.constant 0.000000e+00 : f32
    %27 = vector.broadcast %cst_19 : f32 to vector<96x1xf32>
    %28 = arith.maximumf %26, %27 : vector<96x1xf32>
    %29 = vector.broadcast %19 : vector<96x1xf32> to vector<96x128xf32>
    %30 = arith.subf %13, %29 : vector<96x128xf32>
    %cst_20 = arith.constant 9.99999997E-7 : f32
    %31 = vector.broadcast %cst_20 : f32 to vector<96x1xf32>
    %32 = arith.addf %28, %31 : vector<96x1xf32>
    %33 = math.rsqrt %32 : vector<96x1xf32>
    %34 = vector.broadcast %33 : vector<96x1xf32> to vector<96x128xf32>
    %35 = arith.mulf %30, %34 : vector<96x128xf32>
    %36 = vector.broadcast %14 : vector<1x128xf32> to vector<96x128xf32>
    %37 = arith.mulf %35, %36 : vector<96x128xf32>
    %38 = vector.broadcast %15 : vector<1x128xf32> to vector<96x128xf32>
    %39 = arith.addf %37, %38 : vector<96x128xf32>
    %c0_21 = arith.constant 0 : index
    %c0_22 = arith.constant 0 : index
    %40 = vector.load %arg8[%c0_21, %c0_22] : memref<96x128xf32, #tpu.memory_space<vmem>>, vector<96x128xf32>
    tpu.vector_store %arg8[%c0_21, %c0_22], %39 {strides = array<i32>} : memref<96x128xf32, #tpu.memory_space<vmem>>, vector<96x128xf32>,
    return
  }
  func.func @transform_0(%arg0: i32) -> (i32, i32) {
    %c0_i32 = arith.constant 0 : i32
    %c0_i32_0 = arith.constant 0 : i32
    return %arg0, %c0_i32 : i32, i32
  }
  func.func @transform_1(%arg0: i32) -> (i32, i32) {
    %c0_i32 = arith.constant 0 : i32
    %c0_i32_0 = arith.constant 0 : i32
    %c0_i32_1 = arith.constant 0 : i32
    return %c0_i32, %c0_i32_0 : i32, i32
  }
  func.func @transform_2(%arg0: i32) -> (i32, i32) {
    %c0_i32 = arith.constant 0 : i32
    %c0_i32_0 = arith.constant 0 : i32
    %c0_i32_1 = arith.constant 0 : i32
    return %c0_i32, %c0_i32_0 : i32, i32
  }
  func.func @transform_3(%arg0: i32) -> (i32, i32) {
    %c0_i32 = arith.constant 0 : i32
    %c0_i32_0 = arith.constant 0 : i32
    %c0_i32_1 = arith.constant 0 : i32
    return %c0_i32, %c0_i32_0 : i32, i32
  }
  func.func @transform_4(%arg0: i32) -> (i32, i32) {
    %c0_i32 = arith.constant 0 : i32
    %c0_i32_0 = arith.constant 0 : i32
    %c0_i32_1 = arith.constant 0 : i32
    return %c0_i32, %c0_i32_0 : i32, i32
  }
  func.func @transform_5(%arg0: i32) -> (i32, i32) {
    %c0_i32 = arith.constant 0 : i32
    %c0_i32_0 = arith.constant 0 : i32
    %c0_i32_1 = arith.constant 0 : i32
    return %c0_i32, %c0_i32_0 : i32, i32
  }
  func.func @transform_6(%arg0: i32) -> (i32, i32) {
    %c0_i32 = arith.constant 0 : i32
    %c0_i32_0 = arith.constant 0 : i32
    %c0_i32_1 = arith.constant 0 : i32
    return %c0_i32, %c0_i32_0 : i32, i32
  }
  func.func @transform_7(%arg0: i32) -> (i32, i32) {
    %c0_i32 = arith.constant 0 : i32
    %c0_i32_0 = arith.constant 0 : i32
    return %arg0, %c0_i32 : i32, i32
  }
}

</mosaic_0001>

<llo_original>
// kernel: tpu_custom_call.1
$region0: #{tpu_custom_call.1}
  #allocation0 [shape = 'u32[]', space=smem, size = 0x4, offset = 0x4, fixed_abs, tag = 'smem constant byte address 0x4 - core index']
  #allocation1 [shape = 'u32[144,128]{1,0:T(1,128)}', space=vmem, size = 0x12000, scoped, tag = 'internal scratch']
  %s0 = inlined_call_operand.hbm [shape: f32[192,128], index: 0, kind: input, shape index: {}]
  %s1 = inlined_call_operand.hbm [shape: f32[128,512], index: 1, kind: input, shape index: {}]
  %s2 = inlined_call_operand.hbm [shape: f32[1,512], index: 2, kind: input, shape index: {}]
  %s3 = inlined_call_operand.hbm [shape: f32[512,128], index: 3, kind: input, shape index: {}]
  %s4 = inlined_call_operand.vmem [shape: f32[1,128], index: 4, kind: input, shape index: {}]
  %s5 = inlined_call_operand.vmem [shape: f32[1,128], index: 5, kind: input, shape index: {}]
  %s6 = inlined_call_operand.vmem [shape: f32[1,128], index: 6, kind: input, shape index: {}]
  %s7 = inlined_call_operand.hbm [shape: f32[192,128], index: 7, kind: output, shape index: {}]
  %s8 = sld [smem:[#allocation0]]
  $region77: #{tpu_custom_call.1} parent=0
    _
  %s10 = ssub.s32 1, %s8
  %s11 = scalar_select 0, %s10, %s8
  $region1: #{tpu_custom_call.1} parent=0
    #allocation2 [shape = 'u8[98304]{0}', space=vmem, size = 0x18000, scoped, tag = 'input window, operand 0']
    #allocation3 [shape = 's32[2]{0}', space=sflag, size = 0x8, scoped, tag = 'scoped memory for tpu_custom_call.1']
    #allocation4 [shape = 's32[2]{0}', space=sflag, size = 0x8, scoped, tag = 'scoped memory for tpu_custom_call.1']
    #allocation5 [shape = 'u8[262144]{0}', space=vmem, size = 0x40000, scoped, tag = 'input window, operand 1, single buffered']
    #allocation6 [shape = 's32[1]{0}', space=sflag, size = 0x4, scoped, tag = 'scoped memory for tpu_custom_call.1']
    #allocation7 [shape = 'u8[2048]{0}', space=vmem, size = 0x800, scoped, tag = 'input window, operand 2, single buffered']
    #allocation8 [shape = 'u8[262144]{0}', space=vmem, size = 0x40000, scoped, tag = 'input window, operand 3, single buffered']
    #allocation9 [shape = 's32[1]{0}', space=sflag, size = 0x4, scoped, tag = 'scoped memory for tpu_custom_call.1']
    #allocation10 [shape = 'u8[98304]{0}', space=vmem, size = 0x18000, scoped, tag = 'output window, operand 0']
    %12 = vsyncpa [#allocation3], 0
    %s13 = scalar_lea.sflag [#allocation3], 1
    %14 = vsyncpa %s13, 0
    %15 = vsyncpa [#allocation6], 0
    %16 = vsyncpa [#allocation9], 0
    %17 = vsyncpa [#allocation4], 0
    %s18 = scalar_lea.sflag [#allocation4], 1
    %19 = vsyncpa %s18, 0
    loop: start=0, step=1, limit=4
    $region2: #{tpu_custom_call.1} parent=1 // loop_pre_header
      _
    $region3: #{tpu_custom_call.1} parent=1 // loop_header
      %s21 = sphi 0, %s25
      %p22 = scmp.ge.s32.totalorder %s21, 4
      %s31 = sphi 0, %s33
      %s34 = sphi 0, %s31
      %s35 = sphi 0, %s34
      %s51 = sphi 0, %s35
      %s55 = sphi 0, %s55
      %s57 = sphi 0, %s55
      %s58 = sphi 0, %s57
      %s72 = sphi 0, %s58
      %s76 = sphi 0, %s76
      %s78 = sphi 0, %s76
      %s79 = sphi 0, %s78
      %s93 = sphi 0, %s79
      %s97 = sphi 0, %s97
      %s99 = sphi 0, %s97
      %s100 = sphi 0, %s99
      %s114 = sphi 0, %s100
      %s118 = sphi 0, %s118
      %s120 = sphi 0, %s118
      %s121 = sphi 0, %s120
      %s135 = sphi 0, %s121
      %s139 = sphi 0, %s139
      %s141 = sphi 0, %s139
      %s142 = sphi 0, %s141
      %s156 = sphi 0, %s142
      %s160 = sphi 0, %s160
      %s162 = sphi 0, %s160
      %s163 = sphi 0, %s162
      %s177 = sphi 0, %s163
      %s183 = sphi 0, %s185
      %s186 = sphi 0, %s183
      %s187 = sphi 0, %s186
      %s203 = sphi 0, %s187
    $region4: #{tpu_custom_call.1} parent=1 // loop_header_branch
      %24 = sbr.rel (%p22) target = $region8
    $region5: #{tpu_custom_call.1} parent=1 // loop_body
      %s26 = ssub.s32 %s21, 1
      %s27 = ssub.s32 %s21, 2
      %s28 = sadd.s32 %s21, 1
      %s29 = ssub.s32 %s21, %s28
      %p30 = scmp.eq.s32.totalorder %s29, 0
      %s32 = sadd.s32 %s31, 1
      %s33 = scalar_select %p30, %s31, %s32
      %p36 = pneg %p30
      %p37 = scmp.eq.s32.totalorder %s21, 1
      %p38 = por %p36, %p37
      %p39 = scmp.ne.s32.totalorder %s31, %s34
      %p40 = scmp.eq.s32.totalorder %s21, 0
      %p41 = por %p39, %p40
      %p42 = scmp.ne.s32.totalorder %s31, %s34
      %p43 = scmp.eq.s32.totalorder %s26, 1
      %p44 = por %p42, %p43
      %p45 = scmp.ne.s32.totalorder %s34, %s35
      %p46 = scmp.eq.s32.totalorder %s26, 0
      %p47 = por %p45, %p46
      %p48 = scmp.ne.s32.totalorder %s34, %s35
      %p49 = scmp.eq.s32.totalorder %s27, 1
      %p50 = por %p48, %p49
      %p52 = scmp.ne.s32.totalorder %s35, %s51
      %p53 = scmp.eq.s32.totalorder %s27, 0
      %p54 = por %p52, %p53
      %s56 = sadd.s32 %s55, 1
      %p59 = scmp.eq.s32.totalorder %s21, 1
      %p60 = scmp.ne.s32.totalorder %s55, %s57
      %p61 = scmp.eq.s32.totalorder %s21, 0
      %p62 = por %p60, %p61
      %p63 = scmp.ne.s32.totalorder %s55, %s57
      %p64 = scmp.eq.s32.totalorder %s26, 1
      %p65 = por %p63, %p64
      %p66 = scmp.ne.s32.totalorder %s57, %s58
      %p67 = scmp.eq.s32.totalorder %s26, 0
      %p68 = por %p66, %p67
      %p69 = scmp.ne.s32.totalorder %s57, %s58
      %p70 = scmp.eq.s32.totalorder %s27, 1
      %p71 = por %p69, %p70
      %p73 = scmp.ne.s32.totalorder %s58, %s72
      %p74 = scmp.eq.s32.totalorder %s27, 0
      %p75 = por %p73, %p74
      %s77 = sadd.s32 %s76, 1
      %p80 = scmp.eq.s32.totalorder %s21, 1
      %p81 = scmp.ne.s32.totalorder %s76, %s78
      %p82 = scmp.eq.s32.totalorder %s21, 0
      %p83 = por %p81, %p82
      %p84 = scmp.ne.s32.totalorder %s76, %s78
      %p85 = scmp.eq.s32.totalorder %s26, 1
      %p86 = por %p84, %p85
      %p87 = scmp.ne.s32.totalorder %s78, %s79
      %p88 = scmp.eq.s32.totalorder %s26, 0
      %p89 = por %p87, %p88
      %p90 = scmp.ne.s32.totalorder %s78, %s79
      %p91 = scmp.eq.s32.totalorder %s27, 1
      %p92 = por %p90, %p91
      %p94 = scmp.ne.s32.totalorder %s79, %s93
      %p95 = scmp.eq.s32.totalorder %s27, 0
      %p96 = por %p94, %p95
      %s98 = sadd.s32 %s97, 1
      %p101 = scmp.eq.s32.totalorder %s21, 1
      %p102 = scmp.ne.s32.totalorder %s97, %s99
      %p103 = scmp.eq.s32.totalorder %s21, 0
      %p104 = por %p102, %p103
      %p105 = scmp.ne.s32.totalorder %s97, %s99
      %p106 = scmp.eq.s32.totalorder %s26, 1
      %p107 = por %p105, %p106
      %p108 = scmp.ne.s32.totalorder %s99, %s100
      %p109 = scmp.eq.s32.totalorder %s26, 0
      %p110 = por %p108, %p109
      %p111 = scmp.ne.s32.totalorder %s99, %s100
      %p112 = scmp.eq.s32.totalorder %s27, 1
      %p113 = por %p111, %p112
      %p115 = scmp.ne.s32.totalorder %s100, %s114
      %p116 = scmp.eq.s32.totalorder %s27, 0
      %p117 = por %p115, %p116
      %s119 = sadd.s32 %s118, 1
      %p122 = scmp.eq.s32.totalorder %s21, 1
      %p123 = scmp.ne.s32.totalorder %s118, %s120
      %p124 = scmp.eq.s32.totalorder %s21, 0
      %p125 = por %p123, %p124
      %p126 = scmp.ne.s32.totalorder %s118, %s120
      %p127 = scmp.eq.s32.totalorder %s26, 1
      %p128 = por %p126, %p127
      %p129 = scmp.ne.s32.totalorder %s120, %s121
      %p130 = scmp.eq.s32.totalorder %s26, 0
      %p131 = por %p129, %p130
      %p132 = scmp.ne.s32.totalorder %s120, %s121
      %p133 = scmp.eq.s32.totalorder %s27, 1
      %p134 = por %p132, %p133
      %p136 = scmp.ne.s32.totalorder %s121, %s135
      %p137 = scmp.eq.s32.totalorder %s27, 0
      %p138 = por %p136, %p137
      %s140 = sadd.s32 %s139, 1
      %p143 = scmp.eq.s32.totalorder %s21, 1
      %p144 = scmp.ne.s32.totalorder %s139, %s141
      %p145 = scmp.eq.s32.totalorder %s21, 0
      %p146 = por %p144, %p145
      %p147 = scmp.ne.s32.totalorder %s139, %s141
      %p148 = scmp.eq.s32.totalorder %s26, 1
      %p149 = por %p147, %p148
      %p150 = scmp.ne.s32.totalorder %s141, %s142
      %p151 = scmp.eq.s32.totalorder %s26, 0
      %p152 = por %p150, %p151
      %p153 = scmp.ne.s32.totalorder %s141, %s142
      %p154 = scmp.eq.s32.totalorder %s27, 1
      %p155 = por %p153, %p154
      %p157 = scmp.ne.s32.totalorder %s142, %s156
      %p158 = scmp.eq.s32.totalorder %s27, 0
      %p159 = por %p157, %p158
      %s161 = sadd.s32 %s160, 1
      %p164 = scmp.eq.s32.totalorder %s21, 1
      %p165 = scmp.ne.s32.totalorder %s160, %s162
      %p166 = scmp.eq.s32.totalorder %s21, 0
      %p167 = por %p165, %p166
      %p168 = scmp.ne.s32.totalorder %s160, %s162
      %p169 = scmp.eq.s32.totalorder %s26, 1
      %p170 = por %p168, %p169
      %p171 = scmp.ne.s32.totalorder %s162, %s163
      %p172 = scmp.eq.s32.totalorder %s26, 0
      %p173 = por %p171, %p172
      %p174 = scmp.ne.s32.totalorder %s162, %s163
      %p175 = scmp.eq.s32.totalorder %s27, 1
      %p176 = por %p174, %p175
      %p178 = scmp.ne.s32.totalorder %s163, %s177
      %p179 = scmp.eq.s32.totalorder %s27, 0
      %p180 = por %p178, %p179
      %s181 = ssub.s32 %s21, %s28
      %p182 = scmp.eq.s32.totalorder %s181, 0
      %s184 = sadd.s32 %s183, 1
      %s185 = scalar_select %p182, %s183, %s184
      %p188 = pneg %p182
      %p189 = scmp.eq.s32.totalorder %s21, 1
      %p190 = por %p188, %p189
      %p191 = scmp.ne.s32.totalorder %s183, %s186
      %p192 = scmp.eq.s32.totalorder %s21, 0
      %p193 = por %p191, %p192
      %p194 = scmp.ne.s32.totalorder %s183, %s186
      %p195 = scmp.eq.s32.totalorder %s26, 1
      %p196 = por %p194, %p195
      %p197 = scmp.ne.s32.totalorder %s186, %s187
      %p198 = scmp.eq.s32.totalorder %s26, 0
      %p199 = por %p197, %p198
      %p200 = scmp.ne.s32.totalorder %s186, %s187
      %p201 = scmp.eq.s32.totalorder %s27, 1
      %p202 = por %p200, %p201
      %p204 = scmp.ne.s32.totalorder %s187, %s203
      %p205 = scmp.eq.s32.totalorder %s27, 0
      %p206 = por %p204, %p205
      %p207 = scmp.le.s32.totalorder 1, %s21
      %p208 = scmp.lt.s32.totalorder %s21, 3
      %p209 = pnand %p207, %p208
      %p210 = pneg %p209
      // Predicated region
      $region9: #{tpu_custom_call.1} parent=5 // pred_check
        _
      $region10: #{tpu_custom_call.1} parent=5 // pred_check_branch
        %212 = sbr.rel (%p209) target = $region12
      $region11: #{tpu_custom_call.1} parent=5 // pred_region
        %s213 = ssub.s32 %s21, 1
        // Predicated region
        $region13: #{tpu_custom_call.1} parent=11 // pred_check
          %p214 = pneg %p68
        $region14: #{tpu_custom_call.1} parent=11 // pred_check_branch
          %216 = sbr.rel (%p214) target = $region16
        $region15: #{tpu_custom_call.1} parent=11 // pred_region
          %s218 = ssub.s32 8192, 8192
          %219 = vsyncadd [#allocation6], %s218
          %s220 = sshll.u32 [#allocation5], 4
          %s221 = int_to_ptr.vmem [resolvable:$true] %s220
          %226 = dma.hbm_to_vmem [thread:$0]  %s1, 8192, %s221, [#allocation6], 512, 512, 32
        $region16: #{tpu_custom_call.1} parent=11 // pred_fallthru
          _
        // Predicated region
        $region17: #{tpu_custom_call.1} parent=11 // pred_check
          %p227 = pneg %p89
        $region18: #{tpu_custom_call.1} parent=11 // pred_check_branch
          %229 = sbr.rel (%p227) target = $region20
        $region19: #{tpu_custom_call.1} parent=11 // pred_region
          %s231 = ssub.s32 64, 64
          %232 = vsyncadd [#allocation6], %s231
          %s234 = sshll.u32 [#allocation7], 4
          %s235 = int_to_ptr.vmem [resolvable:$true] %s234
          %237 = dma.hbm_to_vmem [thread:$0]  %s2, 64, %s235, [#allocation6]
        $region20: #{tpu_custom_call.1} parent=11 // pred_fallthru
          _
        // Predicated region
        $region21: #{tpu_custom_call.1} parent=11 // pred_check
          %p238 = pneg %p110
        $region22: #{tpu_custom_call.1} parent=11 // pred_check_branch
          %240 = sbr.rel (%p238) target = $region24
        $region23: #{tpu_custom_call.1} parent=11 // pred_region
          %s242 = ssub.s32 8192, 8192
          %243 = vsyncadd [#allocation9], %s242
          %s244 = sshll.u32 [#allocation8], 4
          %s245 = int_to_ptr.vmem [resolvable:$true] %s244
          %250 = dma.hbm_to_vmem [thread:$0]  %s3, 8192, %s245, [#allocation9], 128, 128, 8
        $region24: #{tpu_custom_call.1} parent=11 // pred_fallthru
          _
        // Predicated region
        $region25: #{tpu_custom_call.1} parent=11 // pred_check
          %p251 = pneg %p131
        $region26: #{tpu_custom_call.1} parent=11 // pred_check_branch
          %253 = sbr.rel (%p251) target = $region28
        $region27: #{tpu_custom_call.1} parent=11 // pred_region
          _
        $region28: #{tpu_custom_call.1} parent=11 // pred_fallthru
          _
        // Predicated region
        $region29: #{tpu_custom_call.1} parent=11 // pred_check
          %p254 = pneg %p152
        $region30: #{tpu_custom_call.1} parent=11 // pred_check_branch
          %256 = sbr.rel (%p254) target = $region32
        $region31: #{tpu_custom_call.1} parent=11 // pred_region
          _
        $region32: #{tpu_custom_call.1} parent=11 // pred_fallthru
          _
        // Predicated region
        $region33: #{tpu_custom_call.1} parent=11 // pred_check
          %p257 = pneg %p173
        $region34: #{tpu_custom_call.1} parent=11 // pred_check_branch
          %259 = sbr.rel (%p257) target = $region36
        $region35: #{tpu_custom_call.1} parent=11 // pred_region
          _
        $region36: #{tpu_custom_call.1} parent=11 // pred_fallthru
          _
      $region12: #{tpu_custom_call.1} parent=5 // pred_fallthru
        _
      %p260 = scmp.lt.s32.totalorder %s21, 2
      // Predicated region
      $region37: #{tpu_custom_call.1} parent=5 // pred_check
        %p261 = pneg %p260
      $region38: #{tpu_custom_call.1} parent=5 // pred_check_branch
        %263 = sbr.rel (%p261) target = $region40
      $region39: #{tpu_custom_call.1} parent=5 // pred_region
        // Predicated region
        $region41: #{tpu_custom_call.1} parent=39 // pred_check
          %p264 = pneg %p41
        $region42: #{tpu_custom_call.1} parent=39 // pred_check_branch
          %266 = sbr.rel (%p264) target = $region44
        $region43: #{tpu_custom_call.1} parent=39 // pred_region
          %s267 = sand.u32 %s31, 1
          %s268 = scalar_lea.sflag [#allocation3], %s267
          %s269 = sand.u32 %s31, 1
          %s270 = smul.addr %s269, 96
          %s271 = scalar_lea.vmem [#allocation2], %s270
          %s272 = smul.u32 12, %s21
          %s274 = ssub.s32 1536, 1536
          %275 = vsyncadd %s268, %s274
          %s276 = smul.addr %s272, 128
          %s277 = scalar_lea.hbm %s0, %s276
          %s278 = sshll.u32 %s271, 4
          %s279 = int_to_ptr.vmem [resolvable:$true] %s278
          %284 = dma.hbm_to_vmem [thread:$0]  %s277, 1536, %s279, %s268, 128, 128, 8
        $region44: #{tpu_custom_call.1} parent=39 // pred_fallthru
          _
      $region40: #{tpu_custom_call.1} parent=5 // pred_fallthru
        _
      %p285 = scmp.le.s32.totalorder 1, %s21
      %p286 = scmp.lt.s32.totalorder %s21, 3
      %p287 = pnand %p285, %p286
      %p288 = pneg %p287
      // Predicated region
      $region45: #{tpu_custom_call.1} parent=5 // pred_check
        _
      $region46: #{tpu_custom_call.1} parent=5 // pred_check_branch
        %290 = sbr.rel (%p287) target = $region48
      $region47: #{tpu_custom_call.1} parent=5 // pred_region
        %s291 = ssub.s32 %s21, 1
        %s292 = sand.u32 %s34, 1
        %s293 = scalar_lea.sflag [#allocation3], %s292
        %s294 = sand.u32 %s34, 1
        %s295 = smul.addr %s294, 96
        %s296 = scalar_lea.vmem [#allocation2], %s295
        // Predicated region
        $region49: #{tpu_custom_call.1} parent=47 // pred_check
          %p297 = pneg %p47
        $region50: #{tpu_custom_call.1} parent=47 // pred_check_branch
          %299 = sbr.rel (%p297) target = $region52
        $region51: #{tpu_custom_call.1} parent=47 // pred_region
          %300 = dma.done %s293, 1536
        $region52: #{tpu_custom_call.1} parent=47 // pred_fallthru
          _
        // Predicated region
        $region53: #{tpu_custom_call.1} parent=47 // pred_check
          %p301 = pneg %p68
        $region54: #{tpu_custom_call.1} parent=47 // pred_check_branch
          %303 = sbr.rel (%p301) target = $region56
        $region55: #{tpu_custom_call.1} parent=47 // pred_region
          %304 = dma.done [#allocation6], 8192
        $region56: #{tpu_custom_call.1} parent=47 // pred_fallthru
          _
        // Predicated region
        $region57: #{tpu_custom_call.1} parent=47 // pred_check
          %p305 = pneg %p89
        $region58: #{tpu_custom_call.1} parent=47 // pred_check_branch
          %307 = sbr.rel (%p305) target = $region60
        $region59: #{tpu_custom_call.1} parent=47 // pred_region
          %308 = dma.done [#allocation6], 64
        $region60: #{tpu_custom_call.1} parent=47 // pred_fallthru
          _
        // Predicated region
        $region61: #{tpu_custom_call.1} parent=47 // pred_check
          %p309 = pneg %p110
        $region62: #{tpu_custom_call.1} parent=47 // pred_check_branch
          %311 = sbr.rel (%p309) target = $region64
        $region63: #{tpu_custom_call.1} parent=47 // pred_region
          %312 = dma.done [#allocation9], 8192
        $region64: #{tpu_custom_call.1} parent=47 // pred_fallthru
          _
        %s313 = sand.u32 %s34, 1
        %s314 = scalar_lea.sflag [#allocation3], %s313
        %s315 = sand.u32 %s34, 1
        %s316 = smul.addr %s315, 96
        %s317 = scalar_lea.vmem [#allocation2], %s316
        %p318 = pneg %p47
        %p319 = pneg %p44
        %p320 = pneg %p68
        %p321 = pneg %p65
        %p322 = pneg %p89
        %p323 = pneg %p86
        %p324 = pneg %p110
        %p325 = pneg %p107
        %p326 = pneg %p131
        %p327 = pneg %p128
        %p328 = pneg %p152
        %p329 = pneg %p149
        %p330 = pneg %p173
        %p331 = pneg %p170
        %p332 = pneg %p199
        %p333 = pneg %p196
        %s334 = sand.u32 %s186, 1
        %s335 = scalar_lea.sflag [#allocation4], %s334
        %s336 = sand.u32 %s186, 1
        %s337 = smul.addr %s336, 96
        %s338 = scalar_lea.vmem [#allocation10], %s337
        %s339 = smul.u32 12, %s26
        %s340 = smul.u32 12, %s26
        %v341 = vld [vmem:[%s296] sm:$0xff]
        %v342 = vld [vmem:[%s296 + $0x8] sm:$0xff]
        %v343 = vld [vmem:[%s296 + $0x10] sm:$0xff]
        %v344 = vld [vmem:[%s296 + $0x18] sm:$0xff]
        %v345 = vld [vmem:[%s296 + $0x20] sm:$0xff]
        %v346 = vld [vmem:[%s296 + $0x28] sm:$0xff]
        %v347 = vld [vmem:[%s296 + $0x30] sm:$0xff]
        %v348 = vld [vmem:[%s296 + $0x38] sm:$0xff]
        %v349 = vld [vmem:[%s296 + $0x40] sm:$0xff]
        %v350 = vld [vmem:[%s296 + $0x48] sm:$0xff]
        %v351 = vld [vmem:[%s296 + $0x50] sm:$0xff]
        %v352 = vld [vmem:[%s296 + $0x58] sm:$0xff]
        %v353 = vld [vmem:[#allocation5] sm:$0xff]
        %v354 = vld [vmem:[#allocation5 + $0x8] sm:$0xff]
        %v355 = vld [vmem:[#allocation5 + $0x10] sm:$0xff]
        %v356 = vld [vmem:[#allocation5 + $0x18] sm:$0xff]
        %v357 = vld [vmem:[#allocation5 + $0x20] sm:$0xff]
        %v358 = vld [vmem:[#allocation5 + $0x28] sm:$0xff]
        %v359 = vld [vmem:[#allocation5 + $0x30] sm:$0xff]
        %v360 = vld [vmem:[#allocation5 + $0x38] sm:$0xff]
        %v361 = vld [vmem:[#allocation5 + $0x40] sm:$0xff]
        %v362 = vld [vmem:[#allocation5 + $0x48] sm:$0xff]
        %v363 = vld [vmem:[#allocation5 + $0x50] sm:$0xff]
        %v364 = vld [vmem:[#allocation5 + $0x58] sm:$0xff]
        %v365 = vld [vmem:[#allocation5 + $0x60] sm:$0xff]
        %v366 = vld [vmem:[#allocation5 + $0x68] sm:$0xff]
        %v367 = vld [vmem:[#allocation5 + $0x70] sm:$0xff]
        %v368 = vld [vmem:[#allocation5 + $0x78] sm:$0xff]
        %v369 = vld [vmem:[#allocation5 + $0x80] sm:$0xff]
        %v370 = vld [vmem:[#allocation5 + $0x88] sm:$0xff]
        %v371 = vld [vmem:[#allocation5 + $0x90] sm:$0xff]
        %v372 = vld [vmem:[#allocation5 + $0x98] sm:$0xff]
        %v373 = vld [vmem:[#allocation5 + $0xa0] sm:$0xff]
        %v374 = vld [vmem:[#allocation5 + $0xa8] sm:$0xff]
        %v375 = vld [vmem:[#allocation5 + $0xb0] sm:$0xff]
        %v376 = vld [vmem:[#allocation5 + $0xb8] sm:$0xff]
        %v377 = vld [vmem:[#allocation5 + $0xc0] sm:$0xff]
        %v378 = vld [vmem:[#allocation5 + $0xc8] sm:$0xff]
        %v379 = vld [vmem:[#allocation5 + $0xd0] sm:$0xff]
        %v380 = vld [vmem:[#allocation5 + $0xd8] sm:$0xff]
        %v381 = vld [vmem:[#allocation5 + $0xe0] sm:$0xff]
        %v382 = vld [vmem:[#allocation5 + $0xe8] sm:$0xff]
        %v383 = vld [vmem:[#allocation5 + $0xf0] sm:$0xff]
        %v384 = vld [vmem:[#allocation5 + $0xf8] sm:$0xff]
        %v385 = vld [vmem:[#allocation5 + $0x100] sm:$0xff]
        %v386 = vld [vmem:[#allocation5 + $0x108] sm:$0xff]
        %v387 = vld [vmem:[#allocation5 + $0x110] sm:$0xff]
        %v388 = vld [vmem:[#allocation5 + $0x118] sm:$0xff]
        %v389 = vld [vmem:[#allocation5 + $0x120] sm:$0xff]
        %v390 = vld [vmem:[#allocation5 + $0x128] sm:$0xff]
        %v391 = vld [vmem:[#allocation5 + $0x130] sm:$0xff]
        %v392 = vld [vmem:[#allocation5 + $0x138] sm:$0xff]
        %v393 = vld [vmem:[#allocation5 + $0x140] sm:$0xff]
        %v394 = vld [vmem:[#allocation5 + $0x148] sm:$0xff]
        %v395 = vld [vmem:[#allocation5 + $0x150] sm:$0xff]
        %v396 = vld [vmem:[#allocation5 + $0x158] sm:$0xff]
        %v397 = vld [vmem:[#allocation5 + $0x160] sm:$0xff]
        %v398 = vld [vmem:[#allocation5 + $0x168] sm:$0xff]
        %v399 = vld [vmem:[#allocation5 + $0x170] sm:$0xff]
        %v400 = vld [vmem:[#allocation5 + $0x178] sm:$0xff]
        %v401 = vld [vmem:[#allocation5 + $0x180] sm:$0xff]
        %v402 = vld [vmem:[#allocation5 + $0x188] sm:$0xff]
        %v403 = vld [vmem:[#allocation5 + $0x190] sm:$0xff]
        %v404 = vld [vmem:[#allocation5 + $0x198] sm:$0xff]
        %v405 = vld [vmem:[#allocation5 + $0x1a0] sm:$0xff]
        %v406 = vld [vmem:[#allocation5 + $0x1a8] sm:$0xff]
        %v407 = vld [vmem:[#allocation5 + $0x1b0] sm:$0xff]
        %v408 = vld [vmem:[#allocation5 + $0x1b8] sm:$0xff]
        %v409 = vld [vmem:[#allocation5 + $0x1c0] sm:$0xff]
        %v410 = vld [vmem:[#allocation5 + $0x1c8] sm:$0xff]
        %v411 = vld [vmem:[#allocation5 + $0x1d0] sm:$0xff]
        %v412 = vld [vmem:[#allocation5 + $0x1d8] sm:$0xff]
        %v413 = vld [vmem:[#allocation5 + $0x1e0] sm:$0xff]
        %v414 = vld [vmem:[#allocation5 + $0x1e8] sm:$0xff]
        %v415 = vld [vmem:[#allocation5 + $0x1f0] sm:$0xff]
        %v416 = vld [vmem:[#allocation5 + $0x1f8] sm:$0xff]
        %v417 = vld [vmem:[#allocation7] sm:$0xf]
        %v419 = vlaneseq
        %v420 = vshrl.u32 %v419, 7
        %v421 = vsub.s32 0, %v420
        %v422 = vrot.slane %v417, %v421
        %v423 = vlaneseq
        %v424 = vshrl.u32 %v423, 7
        %v425 = vsub.s32 1, %v424
        %v426 = vrot.slane %v417, %v425
        %v427 = vlaneseq
        %v428 = vshrl.u32 %v427, 7
        %v429 = vsub.s32 2, %v428
        %v430 = vrot.slane %v417, %v429
        %v431 = vlaneseq
        %v432 = vshrl.u32 %v431, 7
        %v433 = vsub.s32 3, %v432
        %v434 = vrot.slane %v417, %v433
        %439 = vmatprep.subr.mxu0 %v414
        %440 = vmatpush1.msra.mxu0 %v413
        %441 = vmatprep.subr.mxu0 %v410
        %442 = vmatpush1.msra.mxu0 %v409
        %443 = vmatprep.subr.mxu0 %v406
        %444 = vmatpush1.msra.mxu0 %v405
        %445 = vmatprep.subr.mxu0 %v402
        %446 = vmatpush1.msra.mxu0 %v401
        %447 = vmatprep.subr.mxu0 %v398
        %448 = vmatpush1.msra.mxu0 %v397
        %449 = vmatprep.subr.mxu0 %v394
        %450 = vmatpush1.msra.mxu0 %v393
        %451 = vmatprep.subr.mxu0 %v390
        %452 = vmatpush1.msra.mxu0 %v389
        %453 = vmatprep.subr.mxu0 %v386
        %454 = vmatpush1.msra.mxu0 %v385
        %455 = vmatprep.subr.mxu0 %v382
        %456 = vmatpush1.msra.mxu0 %v381
        %457 = vmatprep.subr.mxu0 %v378
        %458 = vmatpush1.msra.mxu0 %v377
        %459 = vmatprep.subr.mxu0 %v374
        %460 = vmatpush1.msra.mxu0 %v373
        %461 = vmatprep.subr.mxu0 %v370
        %462 = vmatpush1.msra.mxu0 %v369
        %463 = vmatprep.subr.mxu0 %v366
        %464 = vmatpush1.msra.mxu0 %v365
        %465 = vmatprep.subr.mxu0 %v362
        %466 = vmatpush1.msra.mxu0 %v361
        %467 = vmatprep.subr.mxu0 %v358
        %468 = vmatpush1.msra.mxu0 %v357
        %469 = vmatprep.subr.mxu0 %v354
        %470 = vmatpush1.msra.mxu0 %v353
        %471 = vmatprep.subr.mxu0 0.0
        %472 = vmatpush2.msra.mxu0 0.0
        %473 = vmatprep.subr.mxu0 0.0
        %474 = vmatpush2.msra.mxu0 0.0
        %475 = vmatprep.subr.mxu0 0.0
        %476 = vmatpush2.msra.mxu0 0.0
        %477 = vmatprep.subr.mxu0 0.0
        %478 = vmatpush2.msra.mxu0 0.0
        %479 = vmatprep.subr.mxu0 0.0
        %480 = vmatpush2.msra.mxu0 0.0
        %481 = vmatprep.subr.mxu0 0.0
        %482 = vmatpush2.msra.mxu0 0.0
        %483 = vmatprep.subr.mxu0 0.0
        %484 = vmatpush2.msra.mxu0 0.0
        %485 = vmatprep.subr.mxu0 0.0
        %486 = vmatpush2.msra.mxu0 0.0
        %487 = vmatprep.subr.mxu0 0.0
        %488 = vmatpush2.msra.mxu0 0.0
        %489 = vmatprep.subr.mxu0 0.0
        %490 = vmatpush2.msra.mxu0 0.0
        %491 = vmatprep.subr.mxu0 0.0
        %492 = vmatpush2.msra.mxu0 0.0
        %493 = vmatprep.subr.mxu0 0.0
        %494 = vmatpush2.msra.mxu0 0.0
        %495 = vmatprep.subr.mxu0 0.0
        %496 = vmatpush2.msra.mxu0 0.0
        %497 = vmatprep.subr.mxu0 0.0
        %498 = vmatpush2.msra.mxu0 0.0
        %499 = vmatprep.subr.mxu0 0.0
        %500 = vmatpush2.msra.mxu0 0.0
        %501 = vmatprep.subr.mxu0 0.0
        %502 = vmatpush2.msra.mxu0 0.0
        %503 = vmatprep.mubr.f32.mxu0 0.0
        %504 = vmatmul.mubr.f32.gmra.mxu0 %v341
        %v505 = vpop.f32.mrf.mxu0
        %v506 = vadd.f32 %v422, %v505
        %v507 = vpop.f32.mrf.mxu0
        %v508 = vadd.f32 %v426, %v507
        %509 = vmatprep.mubr.f32.mxu0 0.0
        %510 = vmatmul.mubr.f32.gmra.mxu0 %v342
        %v511 = vpop.f32.mrf.mxu0
        %v512 = vadd.f32 %v422, %v511
        %v513 = vpop.f32.mrf.mxu0
        %v514 = vadd.f32 %v426, %v513
        %515 = vmatprep.mubr.f32.mxu0 0.0
        %516 = vmatmul.mubr.f32.gmra.mxu0 %v343
        %v517 = vpop.f32.mrf.mxu0
        %v518 = vadd.f32 %v422, %v517
        %v519 = vpop.f32.mrf.mxu0
        %v520 = vadd.f32 %v426, %v519
        %521 = vmatprep.mubr.f32.mxu0 0.0
        %522 = vmatmul.mubr.f32.gmra.mxu0 %v344
        %v523 = vpop.f32.mrf.mxu0
        %v524 = vadd.f32 %v422, %v523
        %v525 = vpop.f32.mrf.mxu0
        %v526 = vadd.f32 %v426, %v525
        %527 = vmatprep.mubr.f32.mxu0 0.0
        %528 = vmatmul.mubr.f32.gmra.mxu0 %v345
        %v529 = vpop.f32.mrf.mxu0
        %v530 = vadd.f32 %v422, %v529
        %v531 = vpop.f32.mrf.mxu0
        %v532 = vadd.f32 %v426, %v531
        %533 = vmatprep.mubr.f32.mxu0 0.0
        %534 = vmatmul.mubr.f32.gmra.mxu0 %v346
        %v535 = vpop.f32.mrf.mxu0
        %v536 = vadd.f32 %v422, %v535
        %v537 = vpop.f32.mrf.mxu0
        %v538 = vadd.f32 %v426, %v537
        %539 = vmatprep.mubr.f32.mxu0 0.0
        %540 = vmatmul.mubr.f32.gmra.mxu0 %v347
        %v541 = vpop.f32.mrf.mxu0
        %v542 = vadd.f32 %v422, %v541
        %v543 = vpop.f32.mrf.mxu0
        %v544 = vadd.f32 %v426, %v543
        %545 = vmatprep.mubr.f32.mxu0 0.0
        %546 = vmatmul.mubr.f32.gmra.mxu0 %v348
        %v547 = vpop.f32.mrf.mxu0
        %v548 = vadd.f32 %v422, %v547
        %v549 = vpop.f32.mrf.mxu0
        %v550 = vadd.f32 %v426, %v549
        %551 = vmatprep.mubr.f32.mxu0 0.0
        %552 = vmatmul.mubr.f32.gmra.mxu0 %v349
        %v553 = vpop.f32.mrf.mxu0
        %v554 = vadd.f32 %v422, %v553
        %v555 = vpop.f32.mrf.mxu0
        %v556 = vadd.f32 %v426, %v555
        %557 = vmatprep.mubr.f32.mxu0 0.0
        %558 = vmatmul.mubr.f32.gmra.mxu0 %v350
        %v559 = vpop.f32.mrf.mxu0
        %v560 = vadd.f32 %v422, %v559
        %v561 = vpop.f32.mrf.mxu0
        %v562 = vadd.f32 %v426, %v561
        %563 = vmatprep.mubr.f32.mxu0 0.0
        %564 = vmatmul.mubr.f32.gmra.mxu0 %v351
        %v565 = vpop.f32.mrf.mxu0
        %v566 = vadd.f32 %v422, %v565
        %v567 = vpop.f32.mrf.mxu0
        %v568 = vadd.f32 %v426, %v567
        %569 = vmatprep.mubr.f32.mxu0 0.0
        %570 = vmatmul.mubr.f32.gmra.mxu0 %v352
        %v571 = vpop.f32.mrf.mxu0
        %v572 = vadd.f32 %v422, %v571
        %v573 = vpop.f32.mrf.mxu0
        %v574 = vadd.f32 %v426, %v573
        %575 = vdwg.mxu0
        %576 = vmatprep.subr.mxu0 %v416
        %577 = vmatpush1.msra.mxu0 %v415
        %578 = vmatprep.subr.mxu0 %v412
        %579 = vmatpush1.msra.mxu0 %v411
        %580 = vmatprep.subr.mxu0 %v408
        %581 = vmatpush1.msra.mxu0 %v407
        %582 = vmatprep.subr.mxu0 %v404
        %583 = vmatpush1.msra.mxu0 %v403
        %584 = vmatprep.subr.mxu0 %v400
        %585 = vmatpush1.msra.mxu0 %v399
        %586 = vmatprep.subr.mxu0 %v396
        %587 = vmatpush1.msra.mxu0 %v395
        %588 = vmatprep.subr.mxu0 %v392
        %589 = vmatpush1.msra.mxu0 %v391
        %590 = vmatprep.subr.mxu0 %v388
        %591 = vmatpush1.msra.mxu0 %v387
        %592 = vmatprep.subr.mxu0 %v384
        %593 = vmatpush1.msra.mxu0 %v383
        %594 = vmatprep.subr.mxu0 %v380
        %595 = vmatpush1.msra.mxu0 %v379
        %596 = vmatprep.subr.mxu0 %v376
        %597 = vmatpush1.msra.mxu0 %v375
        %598 = vmatprep.subr.mxu0 %v372
        %599 = vmatpush1.msra.mxu0 %v371
        %600 = vmatprep.subr.mxu0 %v368
        %601 = vmatpush1.msra.mxu0 %v367
        %602 = vmatprep.subr.mxu0 %v364
        %603 = vmatpush1.msra.mxu0 %v363
        %604 = vmatprep.subr.mxu0 %v360
        %605 = vmatpush1.msra.mxu0 %v359
        %606 = vmatprep.subr.mxu0 %v356
        %607 = vmatpush1.msra.mxu0 %v355
        %608 = vmatprep.subr.mxu0 0.0
        %609 = vmatpush2.msra.mxu0 0.0
        %610 = vmatprep.subr.mxu0 0.0
        %611 = vmatpush2.msra.mxu0 0.0
        %612 = vmatprep.subr.mxu0 0.0
        %613 = vmatpush2.msra.mxu0 0.0
        %614 = vmatprep.subr.mxu0 0.0
        %615 = vmatpush2.msra.mxu0 0.0
        %616 = vmatprep.subr.mxu0 0.0
        %617 = vmatpush2.msra.mxu0 0.0
        %618 = vmatprep.subr.mxu0 0.0
        %619 = vmatpush2.msra.mxu0 0.0
        %620 = vmatprep.subr.mxu0 0.0
        %621 = vmatpush2.msra.mxu0 0.0
        %622 = vmatprep.subr.mxu0 0.0
        %623 = vmatpush2.msra.mxu0 0.0
        %624 = vmatprep.subr.mxu0 0.0
        %625 = vmatpush2.msra.mxu0 0.0
        %626 = vmatprep.subr.mxu0 0.0
        %627 = vmatpush2.msra.mxu0 0.0
        %628 = vmatprep.subr.mxu0 0.0
        %629 = vmatpush2.msra.mxu0 0.0
        %630 = vmatprep.subr.mxu0 0.0
        %631 = vmatpush2.msra.mxu0 0.0
        %632 = vmatprep.subr.mxu0 0.0
        %633 = vmatpush2.msra.mxu0 0.0
        %634 = vmatprep.subr.mxu0 0.0
        %635 = vmatpush2.msra.mxu0 0.0
        %636 = vmatprep.subr.mxu0 0.0
        %637 = vmatpush2.msra.mxu0 0.0
        %638 = vmatprep.subr.mxu0 0.0
        %639 = vmatpush2.msra.mxu0 0.0
        %640 = vmatprep.mubr.f32.mxu0 0.0
        %641 = vmatmul.mubr.f32.gmra.mxu0 %v341
        %v642 = vpop.f32.mrf.mxu0
        %v643 = vadd.f32 %v430, %v642
        %v644 = vpop.f32.mrf.mxu0
        %v645 = vadd.f32 %v434, %v644
        %646 = vmatprep.mubr.f32.mxu0 0.0
        %647 = vmatmul.mubr.f32.gmra.mxu0 %v342
        %v648 = vpop.f32.mrf.mxu0
        %v649 = vadd.f32 %v430, %v648
        %v650 = vpop.f32.mrf.mxu0
        %v651 = vadd.f32 %v434, %v650
        %652 = vmatprep.mubr.f32.mxu0 0.0
        %653 = vmatmul.mubr.f32.gmra.mxu0 %v343
        %v654 = vpop.f32.mrf.mxu0
        %v655 = vadd.f32 %v430, %v654
        %v656 = vpop.f32.mrf.mxu0
        %v657 = vadd.f32 %v434, %v656
        %658 = vmatprep.mubr.f32.mxu0 0.0
        %659 = vmatmul.mubr.f32.gmra.mxu0 %v344
        %v660 = vpop.f32.mrf.mxu0
        %v661 = vadd.f32 %v430, %v660
        %v662 = vpop.f32.mrf.mxu0
        %v663 = vadd.f32 %v434, %v662
        %664 = vmatprep.mubr.f32.mxu0 0.0
        %665 = vmatmul.mubr.f32.gmra.mxu0 %v345
        %v666 = vpop.f32.mrf.mxu0
        %v667 = vadd.f32 %v430, %v666
        %v668 = vpop.f32.mrf.mxu0
        %v669 = vadd.f32 %v434, %v668
        %670 = vmatprep.mubr.f32.mxu0 0.0
        %671 = vmatmul.mubr.f32.gmra.mxu0 %v346
        %v672 = vpop.f32.mrf.mxu0
        %v673 = vadd.f32 %v430, %v672
        %v674 = vpop.f32.mrf.mxu0
        %v675 = vadd.f32 %v434, %v674
        %676 = vmatprep.mubr.f32.mxu0 0.0
        %677 = vmatmul.mubr.f32.gmra.mxu0 %v347
        %v678 = vpop.f32.mrf.mxu0
        %v679 = vadd.f32 %v430, %v678
        %v680 = vpop.f32.mrf.mxu0
        %v681 = vadd.f32 %v434, %v680
        %682 = vmatprep.mubr.f32.mxu0 0.0
        %683 = vmatmul.mubr.f32.gmra.mxu0 %v348
        %v684 = vpop.f32.mrf.mxu0
        %v685 = vadd.f32 %v430, %v684
        %v686 = vpop.f32.mrf.mxu0
        %v687 = vadd.f32 %v434, %v686
        %688 = vmatprep.mubr.f32.mxu0 0.0
        %689 = vmatmul.mubr.f32.gmra.mxu0 %v349
        %v690 = vpop.f32.mrf.mxu0
        %v691 = vadd.f32 %v430, %v690
        %v692 = vpop.f32.mrf.mxu0
        %v693 = vadd.f32 %v434, %v692
        %694 = vmatprep.mubr.f32.mxu0 0.0
        %695 = vmatmul.mubr.f32.gmra.mxu0 %v350
        %v696 = vpop.f32.mrf.mxu0
        %v697 = vadd.f32 %v430, %v696
        %v698 = vpop.f32.mrf.mxu0
        %v699 = vadd.f32 %v434, %v698
        %700 = vmatprep.mubr.f32.mxu0 0.0
        %701 = vmatmul.mubr.f32.gmra.mxu0 %v351
        %v702 = vpop.f32.mrf.mxu0
        %v703 = vadd.f32 %v430, %v702
        %v704 = vpop.f32.mrf.mxu0
        %v705 = vadd.f32 %v434, %v704
        %706 = vmatprep.mubr.f32.mxu0 0.0
        %707 = vmatmul.mubr.f32.gmra.mxu0 %v352
        %v708 = vpop.f32.mrf.mxu0
        %v709 = vadd.f32 %v430, %v708
        %v710 = vpop.f32.mrf.mxu0
        %v711 = vadd.f32 %v434, %v710
        %712 = vdwg.mxu0
        %v713 = vmax.f32 %v506, 0.0
        %v714 = vmax.f32 %v508, 0.0
        %v715 = vmax.f32 %v643, 0.0
        %v716 = vmax.f32 %v645, 0.0
        %v717 = vmax.f32 %v512, 0.0
        %v718 = vmax.f32 %v514, 0.0
        %v719 = vmax.f32 %v649, 0.0
        %v720 = vmax.f32 %v651, 0.0
        %v721 = vmax.f32 %v518, 0.0
        %v722 = vmax.f32 %v520, 0.0
        %v723 = vmax.f32 %v655, 0.0
        %v724 = vmax.f32 %v657, 0.0
        %v725 = vmax.f32 %v524, 0.0
        %v726 = vmax.f32 %v526, 0.0
        %v727 = vmax.f32 %v661, 0.0
        %v728 = vmax.f32 %v663, 0.0
        %v729 = vmax.f32 %v530, 0.0
        %v730 = vmax.f32 %v532, 0.0
        %v731 = vmax.f32 %v667, 0.0
        %v732 = vmax.f32 %v669, 0.0
        %v733 = vmax.f32 %v536, 0.0
        %v734 = vmax.f32 %v538, 0.0
        %v735 = vmax.f32 %v673, 0.0
        %v736 = vmax.f32 %v675, 0.0
        %v737 = vmax.f32 %v542, 0.0
        %v738 = vmax.f32 %v544, 0.0
        %v739 = vmax.f32 %v679, 0.0
        %v740 = vmax.f32 %v681, 0.0
        %v741 = vmax.f32 %v548, 0.0
        %v742 = vmax.f32 %v550, 0.0
        %v743 = vmax.f32 %v685, 0.0
        %v744 = vmax.f32 %v687, 0.0
        %v745 = vmax.f32 %v554, 0.0
        %v746 = vmax.f32 %v556, 0.0
        %v747 = vmax.f32 %v691, 0.0
        %v748 = vmax.f32 %v693, 0.0
        %v749 = vmax.f32 %v560, 0.0
        %v750 = vmax.f32 %v562, 0.0
        %v751 = vmax.f32 %v697, 0.0
        %v752 = vmax.f32 %v699, 0.0
        %v753 = vmax.f32 %v566, 0.0
        %v754 = vmax.f32 %v568, 0.0
        %v755 = vmax.f32 %v703, 0.0
        %v756 = vmax.f32 %v705, 0.0
        %v757 = vmax.f32 %v572, 0.0
        %v758 = vmax.f32 %v574, 0.0
        %v759 = vmax.f32 %v709, 0.0
        %v760 = vmax.f32 %v711, 0.0
        %v761 = vld [vmem:[#allocation8] sm:$0xff]
        %v762 = vld [vmem:[#allocation8 + $0x8] sm:$0xff]
        %v763 = vld [vmem:[#allocation8 + $0x10] sm:$0xff]
        %v764 = vld [vmem:[#allocation8 + $0x18] sm:$0xff]
        %v765 = vld [vmem:[#allocation8 + $0x20] sm:$0xff]
        %v766 = vld [vmem:[#allocation8 + $0x28] sm:$0xff]
        %v767 = vld [vmem:[#allocation8 + $0x30] sm:$0xff]
        %v768 = vld [vmem:[#allocation8 + $0x38] sm:$0xff]
        %v769 = vld [vmem:[#allocation8 + $0x40] sm:$0xff]
        %v770 = vld [vmem:[#allocation8 + $0x48] sm:$0xff]
        %v771 = vld [vmem:[#allocation8 + $0x50] sm:$0xff]
        %v772 = vld [vmem:[#allocation8 + $0x58] sm:$0xff]
        %v773 = vld [vmem:[#allocation8 + $0x60] sm:$0xff]
        %v774 = vld [vmem:[#allocation8 + $0x68] sm:$0xff]
        %v775 = vld [vmem:[#allocation8 + $0x70] sm:$0xff]
        %v776 = vld [vmem:[#allocation8 + $0x78] sm:$0xff]
        %v777 = vld [vmem:[#allocation8 + $0x80] sm:$0xff]
        %v778 = vld [vmem:[#allocation8 + $0x88] sm:$0xff]
        %v779 = vld [vmem:[#allocation8 + $0x90] sm:$0xff]
        %v780 = vld [vmem:[#allocation8 + $0x98] sm:$0xff]
        %v781 = vld [vmem:[#allocation8 + $0xa0] sm:$0xff]
        %v782 = vld [vmem:[#allocation8 + $0xa8] sm:$0xff]
        %v783 = vld [vmem:[#allocation8 + $0xb0] sm:$0xff]
        %v784 = vld [vmem:[#allocation8 + $0xb8] sm:$0xff]
        %v785 = vld [vmem:[#allocation8 + $0xc0] sm:$0xff]
        %v786 = vld [vmem:[#allocation8 + $0xc8] sm:$0xff]
        %v787 = vld [vmem:[#allocation8 + $0xd0] sm:$0xff]
        %v788 = vld [vmem:[#allocation8 + $0xd8] sm:$0xff]
        %v789 = vld [vmem:[#allocation8 + $0xe0] sm:$0xff]
        %v790 = vld [vmem:[#allocation8 + $0xe8] sm:$0xff]
        %v791 = vld [vmem:[#allocation8 + $0xf0] sm:$0xff]
        %v792 = vld [vmem:[#allocation8 + $0xf8] sm:$0xff]
        %v793 = vld [vmem:[#allocation8 + $0x100] sm:$0xff]
        %v794 = vld [vmem:[#allocation8 + $0x108] sm:$0xff]
        %v795 = vld [vmem:[#allocation8 + $0x110] sm:$0xff]
        %v796 = vld [vmem:[#allocation8 + $0x118] sm:$0xff]
        %v797 = vld [vmem:[#allocation8 + $0x120] sm:$0xff]
        %v798 = vld [vmem:[#allocation8 + $0x128] sm:$0xff]
        %v799 = vld [vmem:[#allocation8 + $0x130] sm:$0xff]
        %v800 = vld [vmem:[#allocation8 + $0x138] sm:$0xff]
        %v801 = vld [vmem:[#allocation8 + $0x140] sm:$0xff]
        %v802 = vld [vmem:[#allocation8 + $0x148] sm:$0xff]
        %v803 = vld [vmem:[#allocation8 + $0x150] sm:$0xff]
        %v804 = vld [vmem:[#allocation8 + $0x158] sm:$0xff]
        %v805 = vld [vmem:[#allocation8 + $0x160] sm:$0xff]
        %v806 = vld [vmem:[#allocation8 + $0x168] sm:$0xff]
        %v807 = vld [vmem:[#allocation8 + $0x170] sm:$0xff]
        %v808 = vld [vmem:[#allocation8 + $0x178] sm:$0xff]
        %v809 = vld [vmem:[#allocation8 + $0x180] sm:$0xff]
        %v810 = vld [vmem:[#allocation8 + $0x188] sm:$0xff]
        %v811 = vld [vmem:[#allocation8 + $0x190] sm:$0xff]
        %v812 = vld [vmem:[#allocation8 + $0x198] sm:$0xff]
        %v813 = vld [vmem:[#allocation8 + $0x1a0] sm:$0xff]
        %v814 = vld [vmem:[#allocation8 + $0x1a8] sm:$0xff]
        %v815 = vld [vmem:[#allocation8 + $0x1b0] sm:$0xff]
        %v816 = vld [vmem:[#allocation8 + $0x1b8] sm:$0xff]
        %v817 = vld [vmem:[#allocation8 + $0x1c0] sm:$0xff]
        %v818 = vld [vmem:[#allocation8 + $0x1c8] sm:$0xff]
        %v819 = vld [vmem:[#allocation8 + $0x1d0] sm:$0xff]
        %v820 = vld [vmem:[#allocation8 + $0x1d8] sm:$0xff]
        %v821 = vld [vmem:[#allocation8 + $0x1e0] sm:$0xff]
        %v822 = vld [vmem:[#allocation8 + $0x1e8] sm:$0xff]
        %v823 = vld [vmem:[#allocation8 + $0x1f0] sm:$0xff]
        %v824 = vld [vmem:[#allocation8 + $0x1f8] sm:$0xff]
        %v825 = vld [vmem:[%s4] sm:$0x1]
        %v827 = vlaneseq
        %v828 = vshrl.u32 %v827, 7
        %v829 = vsub.s32 0, %v828
        %v830 = vrot.slane %v825, %v829
        %832 = vmatprep.subr.mxu0 0.0
        %833 = vmatpush1.msra.mxu0 %v776
        %834 = vmatprep.subr.mxu0 0.0
        %835 = vmatpush1.msra.mxu0 %v775
        %836 = vmatprep.subr.mxu0 0.0
        %837 = vmatpush1.msra.mxu0 %v774
        %838 = vmatprep.subr.mxu0 0.0
        %839 = vmatpush1.msra.mxu0 %v773
        %840 = vmatprep.subr.mxu0 0.0
        %841 = vmatpush1.msra.mxu0 %v772
        %842 = vmatprep.subr.mxu0 0.0
        %843 = vmatpush1.msra.mxu0 %v771
        %844 = vmatprep.subr.mxu0 0.0
        %845 = vmatpush1.msra.mxu0 %v770
        %846 = vmatprep.subr.mxu0 0.0
        %847 = vmatpush1.msra.mxu0 %v769
        %848 = vmatprep.subr.mxu0 0.0
        %849 = vmatpush1.msra.mxu0 %v768
        %850 = vmatprep.subr.mxu0 0.0
        %851 = vmatpush1.msra.mxu0 %v767
        %852 = vmatprep.subr.mxu0 0.0
        %853 = vmatpush1.msra.mxu0 %v766
        %854 = vmatprep.subr.mxu0 0.0
        %855 = vmatpush1.msra.mxu0 %v765
        %856 = vmatprep.subr.mxu0 0.0
        %857 = vmatpush1.msra.mxu0 %v764
        %858 = vmatprep.subr.mxu0 0.0
        %859 = vmatpush1.msra.mxu0 %v763
        %860 = vmatprep.subr.mxu0 0.0
        %861 = vmatpush1.msra.mxu0 %v762
        %862 = vmatprep.subr.mxu0 0.0
        %863 = vmatpush1.msra.mxu0 %v761
        %864 = vmatprep.subr.mxu0 0.0
        %865 = vmatpush2.msra.mxu0 %v792
        %866 = vmatprep.subr.mxu0 0.0
        %867 = vmatpush2.msra.mxu0 %v791
        %868 = vmatprep.subr.mxu0 0.0
        %869 = vmatpush2.msra.mxu0 %v790
        %870 = vmatprep.subr.mxu0 0.0
        %871 = vmatpush2.msra.mxu0 %v789
        %872 = vmatprep.subr.mxu0 0.0
        %873 = vmatpush2.msra.mxu0 %v788
        %874 = vmatprep.subr.mxu0 0.0
        %875 = vmatpush2.msra.mxu0 %v787
        %876 = vmatprep.subr.mxu0 0.0
        %877 = vmatpush2.msra.mxu0 %v786
        %878 = vmatprep.subr.mxu0 0.0
        %879 = vmatpush2.msra.mxu0 %v785
        %880 = vmatprep.subr.mxu0 0.0
        %881 = vmatpush2.msra.mxu0 %v784
        %882 = vmatprep.subr.mxu0 0.0
        %883 = vmatpush2.msra.mxu0 %v783
        %884 = vmatprep.subr.mxu0 0.0
        %885 = vmatpush2.msra.mxu0 %v782
        %886 = vmatprep.subr.mxu0 0.0
        %887 = vmatpush2.msra.mxu0 %v781
        %888 = vmatprep.subr.mxu0 0.0
        %889 = vmatpush2.msra.mxu0 %v780
        %890 = vmatprep.subr.mxu0 0.0
        %891 = vmatpush2.msra.mxu0 %v779
        %892 = vmatprep.subr.mxu0 0.0
        %893 = vmatpush2.msra.mxu0 %v778
        %894 = vmatprep.subr.mxu0 0.0
        %895 = vmatpush2.msra.mxu0 %v777
        %896 = vmatprep.mubr.f32.mxu0 %v714
        %897 = vmatmul.mubr.f32.gmra.mxu0 %v713
        %v898 = vpop.f32.mrf.mxu0
        %v899 = vadd.f32 %v830, %v898
        %v900 = vpop.f32.mrf.mxu0
        %901 = vmatprep.mubr.f32.mxu0 %v718
        %902 = vmatmul.mubr.f32.gmra.mxu0 %v717
        %v903 = vpop.f32.mrf.mxu0
        %v904 = vadd.f32 %v830, %v903
        %v905 = vpop.f32.mrf.mxu0
        %906 = vmatprep.mubr.f32.mxu0 %v722
        %907 = vmatmul.mubr.f32.gmra.mxu0 %v721
        %v908 = vpop.f32.mrf.mxu0
        %v909 = vadd.f32 %v830, %v908
        %v910 = vpop.f32.mrf.mxu0
        %911 = vmatprep.mubr.f32.mxu0 %v726
        %912 = vmatmul.mubr.f32.gmra.mxu0 %v725
        %v913 = vpop.f32.mrf.mxu0
        %v914 = vadd.f32 %v830, %v913
        %v915 = vpop.f32.mrf.mxu0
        %916 = vmatprep.mubr.f32.mxu0 %v730
        %917 = vmatmul.mubr.f32.gmra.mxu0 %v729
        %v918 = vpop.f32.mrf.mxu0
        %v919 = vadd.f32 %v830, %v918
        %v920 = vpop.f32.mrf.mxu0
        %921 = vmatprep.mubr.f32.mxu0 %v734
        %922 = vmatmul.mubr.f32.gmra.mxu0 %v733
        %v923 = vpop.f32.mrf.mxu0
        %v924 = vadd.f32 %v830, %v923
        %v925 = vpop.f32.mrf.mxu0
        %926 = vmatprep.mubr.f32.mxu0 %v738
        %927 = vmatmul.mubr.f32.gmra.mxu0 %v737
        %v928 = vpop.f32.mrf.mxu0
        %v929 = vadd.f32 %v830, %v928
        %v930 = vpop.f32.mrf.mxu0
        %931 = vmatprep.mubr.f32.mxu0 %v742
        %932 = vmatmul.mubr.f32.gmra.mxu0 %v741
        %v933 = vpop.f32.mrf.mxu0
        %v934 = vadd.f32 %v830, %v933
        %v935 = vpop.f32.mrf.mxu0
        %936 = vmatprep.mubr.f32.mxu0 %v746
        %937 = vmatmul.mubr.f32.gmra.mxu0 %v745
        %v938 = vpop.f32.mrf.mxu0
        %v939 = vadd.f32 %v830, %v938
        %v940 = vpop.f32.mrf.mxu0
        %941 = vmatprep.mubr.f32.mxu0 %v750
        %942 = vmatmul.mubr.f32.gmra.mxu0 %v749
        %v943 = vpop.f32.mrf.mxu0
        %v944 = vadd.f32 %v830, %v943
        %v945 = vpop.f32.mrf.mxu0
        %946 = vmatprep.mubr.f32.mxu0 %v754
        %947 = vmatmul.mubr.f32.gmra.mxu0 %v753
        %v948 = vpop.f32.mrf.mxu0
        %v949 = vadd.f32 %v830, %v948
        %v950 = vpop.f32.mrf.mxu0
        %951 = vmatprep.mubr.f32.mxu0 %v758
        %952 = vmatmul.mubr.f32.gmra.mxu0 %v757
        %v953 = vpop.f32.mrf.mxu0
        %v954 = vadd.f32 %v830, %v953
        %v955 = vpop.f32.mrf.mxu0
        %956 = vdwg.mxu0
        %957 = vmatprep.subr.mxu0 0.0
        %958 = vmatpush1.msra.mxu0 %v808
        %959 = vmatprep.subr.mxu0 0.0
        %960 = vmatpush1.msra.mxu0 %v807
        %961 = vmatprep.subr.mxu0 0.0
        %962 = vmatpush1.msra.mxu0 %v806
        %963 = vmatprep.subr.mxu0 0.0
        %964 = vmatpush1.msra.mxu0 %v805
        %965 = vmatprep.subr.mxu0 0.0
        %966 = vmatpush1.msra.mxu0 %v804
        %967 = vmatprep.subr.mxu0 0.0
        %968 = vmatpush1.msra.mxu0 %v803
        %969 = vmatprep.subr.mxu0 0.0
        %970 = vmatpush1.msra.mxu0 %v802
        %971 = vmatprep.subr.mxu0 0.0
        %972 = vmatpush1.msra.mxu0 %v801
        %973 = vmatprep.subr.mxu0 0.0
        %974 = vmatpush1.msra.mxu0 %v800
        %975 = vmatprep.subr.mxu0 0.0
        %976 = vmatpush1.msra.mxu0 %v799
        %977 = vmatprep.subr.mxu0 0.0
        %978 = vmatpush1.msra.mxu0 %v798
        %979 = vmatprep.subr.mxu0 0.0
        %980 = vmatpush1.msra.mxu0 %v797
        %981 = vmatprep.subr.mxu0 0.0
        %982 = vmatpush1.msra.mxu0 %v796
        %983 = vmatprep.subr.mxu0 0.0
        %984 = vmatpush1.msra.mxu0 %v795
        %985 = vmatprep.subr.mxu0 0.0
        %986 = vmatpush1.msra.mxu0 %v794
        %987 = vmatprep.subr.mxu0 0.0
        %988 = vmatpush1.msra.mxu0 %v793
        %989 = vmatprep.subr.mxu0 0.0
        %990 = vmatpush2.msra.mxu0 %v824
        %991 = vmatprep.subr.mxu0 0.0
        %992 = vmatpush2.msra.mxu0 %v823
        %993 = vmatprep.subr.mxu0 0.0
        %994 = vmatpush2.msra.mxu0 %v822
        %995 = vmatprep.subr.mxu0 0.0
        %996 = vmatpush2.msra.mxu0 %v821
        %997 = vmatprep.subr.mxu0 0.0
        %998 = vmatpush2.msra.mxu0 %v820
        %999 = vmatprep.subr.mxu0 0.0
        %1000 = vmatpush2.msra.mxu0 %v819
        %1001 = vmatprep.subr.mxu0 0.0
        %1002 = vmatpush2.msra.mxu0 %v818
        %1003 = vmatprep.subr.mxu0 0.0
        %1004 = vmatpush2.msra.mxu0 %v817
        %1005 = vmatprep.subr.mxu0 0.0
        %1006 = vmatpush2.msra.mxu0 %v816
        %1007 = vmatprep.subr.mxu0 0.0
        %1008 = vmatpush2.msra.mxu0 %v815
        %1009 = vmatprep.subr.mxu0 0.0
        %1010 = vmatpush2.msra.mxu0 %v814
        %1011 = vmatprep.subr.mxu0 0.0
        %1012 = vmatpush2.msra.mxu0 %v813
        %1013 = vmatprep.subr.mxu0 0.0
        %1014 = vmatpush2.msra.mxu0 %v812
        %1015 = vmatprep.subr.mxu0 0.0
        %1016 = vmatpush2.msra.mxu0 %v811
        %1017 = vmatprep.subr.mxu0 0.0
        %1018 = vmatpush2.msra.mxu0 %v810
        %1019 = vmatprep.subr.mxu0 0.0
        %1020 = vmatpush2.msra.mxu0 %v809
        %1021 = vmatprep.mubr.f32.mxu0 %v716
        %1022 = vmatmul.mubr.f32.gmra.mxu0 %v715
        %v1023 = vpop.f32.mrf.mxu0
        %v1024 = vadd.f32 %v899, %v1023
        %v1025 = vpop.f32.mrf.mxu0
        %1026 = vmatprep.mubr.f32.mxu0 %v720
        %1027 = vmatmul.mubr.f32.gmra.mxu0 %v719
        %v1028 = vpop.f32.mrf.mxu0
        %v1029 = vadd.f32 %v904, %v1028
        %v1030 = vpop.f32.mrf.mxu0
        %1031 = vmatprep.mubr.f32.mxu0 %v724
        %1032 = vmatmul.mubr.f32.gmra.mxu0 %v723
        %v1033 = vpop.f32.mrf.mxu0
        %v1034 = vadd.f32 %v909, %v1033
        %v1035 = vpop.f32.mrf.mxu0
        %1036 = vmatprep.mubr.f32.mxu0 %v728
        %1037 = vmatmul.mubr.f32.gmra.mxu0 %v727
        %v1038 = vpop.f32.mrf.mxu0
        %v1039 = vadd.f32 %v914, %v1038
        %v1040 = vpop.f32.mrf.mxu0
        %1041 = vmatprep.mubr.f32.mxu0 %v732
        %1042 = vmatmul.mubr.f32.gmra.mxu0 %v731
        %v1043 = vpop.f32.mrf.mxu0
        %v1044 = vadd.f32 %v919, %v1043
        %v1045 = vpop.f32.mrf.mxu0
        %1046 = vmatprep.mubr.f32.mxu0 %v736
        %1047 = vmatmul.mubr.f32.gmra.mxu0 %v735
        %v1048 = vpop.f32.mrf.mxu0
        %v1049 = vadd.f32 %v924, %v1048
        %v1050 = vpop.f32.mrf.mxu0
        %1051 = vmatprep.mubr.f32.mxu0 %v740
        %1052 = vmatmul.mubr.f32.gmra.mxu0 %v739
        %v1053 = vpop.f32.mrf.mxu0
        %v1054 = vadd.f32 %v929, %v1053
        %v1055 = vpop.f32.mrf.mxu0
        %1056 = vmatprep.mubr.f32.mxu0 %v744
        %1057 = vmatmul.mubr.f32.gmra.mxu0 %v743
        %v1058 = vpop.f32.mrf.mxu0
        %v1059 = vadd.f32 %v934, %v1058
        %v1060 = vpop.f32.mrf.mxu0
        %1061 = vmatprep.mubr.f32.mxu0 %v748
        %1062 = vmatmul.mubr.f32.gmra.mxu0 %v747
        %v1063 = vpop.f32.mrf.mxu0
        %v1064 = vadd.f32 %v939, %v1063
        %v1065 = vpop.f32.mrf.mxu0
        %1066 = vmatprep.mubr.f32.mxu0 %v752
        %1067 = vmatmul.mubr.f32.gmra.mxu0 %v751
        %v1068 = vpop.f32.mrf.mxu0
        %v1069 = vadd.f32 %v944, %v1068
        %v1070 = vpop.f32.mrf.mxu0
        %1071 = vmatprep.mubr.f32.mxu0 %v756
        %1072 = vmatmul.mubr.f32.gmra.mxu0 %v755
        %v1073 = vpop.f32.mrf.mxu0
        %v1074 = vadd.f32 %v949, %v1073
        %v1075 = vpop.f32.mrf.mxu0
        %1076 = vmatprep.mubr.f32.mxu0 %v760
        %1077 = vmatmul.mubr.f32.gmra.mxu0 %v759
        %v1078 = vpop.f32.mrf.mxu0
        %v1079 = vadd.f32 %v954, %v1078
        %v1080 = vpop.f32.mrf.mxu0
        %1081 = vdwg.mxu0
        %v1082 = vadd.f32 %v1024, %v341
        %v1083 = vadd.f32 %v1029, %v342
        %v1084 = vadd.f32 %v1034, %v343
        %v1085 = vadd.f32 %v1039, %v344
        %v1086 = vadd.f32 %v1044, %v345
        %v1087 = vadd.f32 %v1049, %v346
        %v1088 = vadd.f32 %v1054, %v347
        %v1089 = vadd.f32 %v1059, %v348
        %v1090 = vadd.f32 %v1064, %v349
        %v1091 = vadd.f32 %v1069, %v350
        %v1092 = vadd.f32 %v1074, %v351
        %v1093 = vadd.f32 %v1079, %v352
        %v1094 = vld [vmem:[%s5] sm:$0x1]
        %v1095 = vld [vmem:[%s6] sm:$0x1]
        %1096 = vadd.xlane.f32.xlu0 %v1082
        %v1097 = vpop.xlane.xlu0 %1096
        %1098 = vadd.xlane.f32.xlu0 %v1083
        %v1099 = vpop.xlane.xlu0 %1098
        %1100 = vadd.xlane.f32.xlu0 %v1084
        %v1101 = vpop.xlane.xlu0 %1100
        %1102 = vadd.xlane.f32.xlu0 %v1085
        %v1103 = vpop.xlane.xlu0 %1102
        %1104 = vadd.xlane.f32.xlu0 %v1086
        %v1105 = vpop.xlane.xlu0 %1104
        %1106 = vadd.xlane.f32.xlu0 %v1087
        %v1107 = vpop.xlane.xlu0 %1106
        %1108 = vadd.xlane.f32.xlu0 %v1088
        %v1109 = vpop.xlane.xlu0 %1108
        %1110 = vadd.xlane.f32.xlu0 %v1089
        %v1111 = vpop.xlane.xlu0 %1110
        %1112 = vadd.xlane.f32.xlu0 %v1090
        %v1113 = vpop.xlane.xlu0 %1112
        %1114 = vadd.xlane.f32.xlu0 %v1091
        %v1115 = vpop.xlane.xlu0 %1114
        %1116 = vadd.xlane.f32.xlu0 %v1092
        %v1117 = vpop.xlane.xlu0 %1116
        %1118 = vadd.xlane.f32.xlu0 %v1093
        %v1119 = vpop.xlane.xlu0 %1118
        %v1120 = vrcp.pop 128.0
        %v1121 = vmul.f32 %v1097, %v1120
        %v1122 = vmul.f32 %v1099, %v1120
        %v1123 = vmul.f32 %v1101, %v1120
        %v1124 = vmul.f32 %v1103, %v1120
        %v1125 = vmul.f32 %v1105, %v1120
        %v1126 = vmul.f32 %v1107, %v1120
        %v1127 = vmul.f32 %v1109, %v1120
        %v1128 = vmul.f32 %v1111, %v1120
        %v1129 = vmul.f32 %v1113, %v1120
        %v1130 = vmul.f32 %v1115, %v1120
        %v1131 = vmul.f32 %v1117, %v1120
        %v1132 = vmul.f32 %v1119, %v1120
        %v1133 = vsub.f32 %v1082, %v1121
        %v1134 = vsub.f32 %v1083, %v1122
        %v1135 = vsub.f32 %v1084, %v1123
        %v1136 = vsub.f32 %v1085, %v1124
        %v1137 = vsub.f32 %v1086, %v1125
        %v1138 = vsub.f32 %v1087, %v1126
        %v1139 = vsub.f32 %v1088, %v1127
        %v1140 = vsub.f32 %v1089, %v1128
        %v1141 = vsub.f32 %v1090, %v1129
        %v1142 = vsub.f32 %v1091, %v1130
        %v1143 = vsub.f32 %v1092, %v1131
        %v1144 = vsub.f32 %v1093, %v1132
        %v1145 = vmul.f32 %v1133, %v1133
        %v1146 = vmul.f32 %v1134, %v1134
        %v1147 = vmul.f32 %v1135, %v1135
        %v1148 = vmul.f32 %v1136, %v1136
        %v1149 = vmul.f32 %v1137, %v1137
        %v1150 = vmul.f32 %v1138, %v1138
        %v1151 = vmul.f32 %v1139, %v1139
        %v1152 = vmul.f32 %v1140, %v1140
        %v1153 = vmul.f32 %v1141, %v1141
        %v1154 = vmul.f32 %v1142, %v1142
        %v1155 = vmul.f32 %v1143, %v1143
        %v1156 = vmul.f32 %v1144, %v1144
        %1157 = vadd.xlane.f32.xlu0 %v1145
        %v1158 = vpop.xlane.xlu0 %1157
        %1159 = vadd.xlane.f32.xlu0 %v1146
        %v1160 = vpop.xlane.xlu0 %1159
        %1161 = vadd.xlane.f32.xlu0 %v1147
        %v1162 = vpop.xlane.xlu0 %1161
        %1163 = vadd.xlane.f32.xlu0 %v1148
        %v1164 = vpop.xlane.xlu0 %1163
        %1165 = vadd.xlane.f32.xlu0 %v1149
        %v1166 = vpop.xlane.xlu0 %1165
        %1167 = vadd.xlane.f32.xlu0 %v1150
        %v1168 = vpop.xlane.xlu0 %1167
        %1169 = vadd.xlane.f32.xlu0 %v1151
        %v1170 = vpop.xlane.xlu0 %1169
        %1171 = vadd.xlane.f32.xlu0 %v1152
        %v1172 = vpop.xlane.xlu0 %1171
        %1173 = vadd.xlane.f32.xlu0 %v1153
        %v1174 = vpop.xlane.xlu0 %1173
        %1175 = vadd.xlane.f32.xlu0 %v1154
        %v1176 = vpop.xlane.xlu0 %1175
        %1177 = vadd.xlane.f32.xlu0 %v1155
        %v1178 = vpop.xlane.xlu0 %1177
        %1179 = vadd.xlane.f32.xlu0 %v1156
        %v1180 = vpop.xlane.xlu0 %1179
        %v1181 = vmul.f32 %v1158, %v1120
        %v1182 = vmul.f32 %v1160, %v1120
        %v1183 = vmul.f32 %v1162, %v1120
        %v1184 = vmul.f32 %v1164, %v1120
        %v1185 = vmul.f32 %v1166, %v1120
        %v1186 = vmul.f32 %v1168, %v1120
        %v1187 = vmul.f32 %v1170, %v1120
        %v1188 = vmul.f32 %v1172, %v1120
        %v1189 = vmul.f32 %v1174, %v1120
        %v1190 = vmul.f32 %v1176, %v1120
        %v1191 = vmul.f32 %v1178, %v1120
        %v1192 = vmul.f32 %v1180, %v1120
        %v1193 = vmax.f32 %v1181, 0.0
        %v1194 = vmax.f32 %v1182, 0.0
        %v1195 = vmax.f32 %v1183, 0.0
        %v1196 = vmax.f32 %v1184, 0.0
        %v1197 = vmax.f32 %v1185, 0.0
        %v1198 = vmax.f32 %v1186, 0.0
        %v1199 = vmax.f32 %v1187, 0.0
        %v1200 = vmax.f32 %v1188, 0.0
        %v1201 = vmax.f32 %v1189, 0.0
        %v1202 = vmax.f32 %v1190, 0.0
        %v1203 = vmax.f32 %v1191, 0.0
        %v1204 = vmax.f32 %v1192, 0.0
        %v1205 = vadd.f32 %v1193, 1e-06
        %v1206 = vadd.f32 %v1194, 1e-06
        %v1207 = vadd.f32 %v1195, 1e-06
        %v1208 = vadd.f32 %v1196, 1e-06
        %v1209 = vadd.f32 %v1197, 1e-06
        %v1210 = vadd.f32 %v1198, 1e-06
        %v1211 = vadd.f32 %v1199, 1e-06
        %v1212 = vadd.f32 %v1200, 1e-06
        %v1213 = vadd.f32 %v1201, 1e-06
        %v1214 = vadd.f32 %v1202, 1e-06
        %v1215 = vadd.f32 %v1203, 1e-06
        %v1216 = vadd.f32 %v1204, 1e-06
        %v1217 = vrsqrt.pop %v1205
        %v1218 = vrsqrt.pop %v1206
        %v1219 = vrsqrt.pop %v1207
        %v1220 = vrsqrt.pop %v1208
        %v1221 = vrsqrt.pop %v1209
        %v1222 = vrsqrt.pop %v1210
        %v1223 = vrsqrt.pop %v1211
        %v1224 = vrsqrt.pop %v1212
        %v1225 = vrsqrt.pop %v1213
        %v1226 = vrsqrt.pop %v1214
        %v1227 = vrsqrt.pop %v1215
        %v1228 = vrsqrt.pop %v1216
        %v1229 = vmul.f32 %v1133, %v1217
        %v1230 = vmul.f32 %v1134, %v1218
        %v1231 = vmul.f32 %v1135, %v1219
        %v1232 = vmul.f32 %v1136, %v1220
        %v1233 = vmul.f32 %v1137, %v1221
        %v1234 = vmul.f32 %v1138, %v1222
        %v1235 = vmul.f32 %v1139, %v1223
        %v1236 = vmul.f32 %v1140, %v1224
        %v1237 = vmul.f32 %v1141, %v1225
        %v1238 = vmul.f32 %v1142, %v1226
        %v1239 = vmul.f32 %v1143, %v1227
        %v1240 = vmul.f32 %v1144, %v1228
        %v1242 = vlaneseq
        %v1243 = vshrl.u32 %v1242, 7
        %v1244 = vsub.s32 0, %v1243
        %v1245 = vrot.slane %v1094, %v1244
        %v1247 = vmul.f32 %v1229, %v1245
        %v1248 = vmul.f32 %v1230, %v1245
        %v1249 = vmul.f32 %v1231, %v1245
        %v1250 = vmul.f32 %v1232, %v1245
        %v1251 = vmul.f32 %v1233, %v1245
        %v1252 = vmul.f32 %v1234, %v1245
        %v1253 = vmul.f32 %v1235, %v1245
        %v1254 = vmul.f32 %v1236, %v1245
        %v1255 = vmul.f32 %v1237, %v1245
        %v1256 = vmul.f32 %v1238, %v1245
        %v1257 = vmul.f32 %v1239, %v1245
        %v1258 = vmul.f32 %v1240, %v1245
        %v1260 = vlaneseq
        %v1261 = vshrl.u32 %v1260, 7
        %v1262 = vsub.s32 0, %v1261
        %v1263 = vrot.slane %v1095, %v1262
        %v1265 = vadd.f32 %v1247, %v1263
        %v1266 = vadd.f32 %v1248, %v1263
        %v1267 = vadd.f32 %v1249, %v1263
        %v1268 = vadd.f32 %v1250, %v1263
        %v1269 = vadd.f32 %v1251, %v1263
        %v1270 = vadd.f32 %v1252, %v1263
        %v1271 = vadd.f32 %v1253, %v1263
        %v1272 = vadd.f32 %v1254, %v1263
        %v1273 = vadd.f32 %v1255, %v1263
        %v1274 = vadd.f32 %v1256, %v1263
        %v1275 = vadd.f32 %v1257, %v1263
        %v1276 = vadd.f32 %v1258, %v1263
        %1277 = vst [vmem:[%s338] sm:$0xff] %v1265
        %1278 = vst [vmem:[%s338 + $0x8] sm:$0xff] %v1266
        %1279 = vst [vmem:[%s338 + $0x10] sm:$0xff] %v1267
        %1280 = vst [vmem:[%s338 + $0x18] sm:$0xff] %v1268
        %1281 = vst [vmem:[%s338 + $0x20] sm:$0xff] %v1269
        %1282 = vst [vmem:[%s338 + $0x28] sm:$0xff] %v1270
        %1283 = vst [vmem:[%s338 + $0x30] sm:$0xff] %v1271
        %1284 = vst [vmem:[%s338 + $0x38] sm:$0xff] %v1272
        %1285 = vst [vmem:[%s338 + $0x40] sm:$0xff] %v1273
        %1286 = vst [vmem:[%s338 + $0x48] sm:$0xff] %v1274
        %1287 = vst [vmem:[%s338 + $0x50] sm:$0xff] %v1275
        %1288 = vst [vmem:[%s338 + $0x58] sm:$0xff] %v1276
        %s1289 = sand.u32 %s186, 1
        %s1290 = scalar_lea.sflag [#allocation4], %s1289
        %s1291 = sand.u32 %s186, 1
        %s1292 = smul.addr %s1291, 96
        %s1293 = scalar_lea.vmem [#allocation10], %s1292
        // Predicated region
        $region65: #{tpu_custom_call.1} parent=47 // pred_check
          %p1294 = pneg %p196
        $region66: #{tpu_custom_call.1} parent=47 // pred_check_branch
          %1296 = sbr.rel (%p1294) target = $region68
        $region67: #{tpu_custom_call.1} parent=47 // pred_region
          %s1297 = smul.u32 12, %s26
          %s1299 = ssub.s32 1536, 1536
          %1300 = vsyncadd %s1290, %s1299
          %s1301 = smul.addr %s1297, 128
          %s1302 = scalar_lea.hbm %s7, %s1301
          %s1303 = sshll.u32 %s1293, 4
          %s1304 = int_to_ptr.vmem [resolvable:$true] %s1303
          %1309 = dma.vmem_to_hbm [thread:$0]  %s1304, 1536, %s1302, %s1290, 128, 128, 8
        $region68: #{tpu_custom_call.1} parent=47 // pred_fallthru
          _
      $region48: #{tpu_custom_call.1} parent=5 // pred_fallthru
        _
      %p1310 = scmp.le.s32.totalorder 2, %s21
      // Predicated region
      $region69: #{tpu_custom_call.1} parent=5 // pred_check
        %p1311 = pneg %p1310
      $region70: #{tpu_custom_call.1} parent=5 // pred_check_branch
        %1313 = sbr.rel (%p1311) target = $region72
      $region71: #{tpu_custom_call.1} parent=5 // pred_region
        %s1314 = ssub.s32 %s21, 2
        // Predicated region
        $region73: #{tpu_custom_call.1} parent=71 // pred_check
          %p1315 = pneg %p202
        $region74: #{tpu_custom_call.1} parent=71 // pred_check_branch
          %1317 = sbr.rel (%p1315) target = $region76
        $region75: #{tpu_custom_call.1} parent=71 // pred_region
          %s1318 = sand.u32 %s187, 1
          %s1319 = scalar_lea.sflag [#allocation4], %s1318
          %s1320 = sand.u32 %s187, 1
          %s1321 = smul.addr %s1320, 96
          %s1322 = scalar_lea.vmem [#allocation10], %s1321
          %1323 = dma.done %s1319, 1536
        $region76: #{tpu_custom_call.1} parent=71 // pred_fallthru
          _
      $region72: #{tpu_custom_call.1} parent=5 // pred_fallthru
        _
    $region6: #{tpu_custom_call.1} parent=1 // loop_footer
      %s25 = sadd.s32 1, %s21
    $region7: #{tpu_custom_call.1} parent=1 // loop_footer_branch
      %20 = sbr.rel target = $region3
    $region8: #{tpu_custom_call.1} parent=1 // loop_exit
      _
    %1324 = vsyncpa [#allocation3], 1
    %s1325 = scalar_lea.sflag [#allocation3], 1
    %1326 = vsyncpa %s1325, 1
    %1327 = vsyncpa [#allocation6], 1
    %1328 = vsyncpa [#allocation9], 1
    %1329 = vsyncpa [#allocation4], 1
    %s1330 = scalar_lea.sflag [#allocation4], 1
    %1331 = vsyncpa %s1330, 1

</llo_original>
